<compile_context>
chip_gen: v5e
topology: v5e:2x2
jax: 0.10.0
libtpu: 0.0.40
codegen_flags: <defaults>
</compile_context>

<pallas_src>
import functools

import jax
import jax.numpy as jnp
from jax.experimental import pallas as pl
from jax.experimental.pallas import tpu as pltpu

_LANE = 128
_SUBLANE = 8


def _round_up(n, m):
    return ((n + m - 1) // m) * m


def _pad2(a, rows, cols):
    r, c = a.shape
    if r == rows and c == cols:
        return a
    return jnp.pad(a, ((0, rows - r), (0, cols - c)))


def _vmem_capacity_bytes():
    try:
        return int(pltpu.get_tpu_info().vmem_capacity_bytes)
    except Exception:
        return 64 * 1024 * 1024   # conservative (v7x per-TC) fallback


def _resident_spec(shape):
    """Constant-index_map BlockSpec for weights/biases; single-buffered when supported."""
    try:
        return pl.BlockSpec(shape, lambda i: (0, 0), pipeline_mode=pl.Buffered(1))
    except TypeError:   # older Pallas without pipeline_mode kwarg
        return pl.BlockSpec(shape, lambda i: (0, 0))


def _ae_kernel(x_ref,
               w1, w2, w3, wz, w4, w5, w6, wx,
               b1, b2, b3, bz, b4, b5, b6, bx,
               xbar_ref, h1_ref, h2_ref, h3_ref, z_ref):
    """Fused forward pass of the 8-layer MLP autoencoder.

    Matmuls run in the weights' dtype (f32 exact / bf16 fast) with f32 accumulation on the
    MXU; bias add and ReLU stay in f32 on the VPU.  Each intermediate output is stored as
    soon as it is computed so its f32 copy does not stay live across the whole kernel.
    """
    compute_dtype = w1.dtype

    def linear(h, w_ref, b_ref, relu):
        y = jnp.dot(h.astype(compute_dtype), w_ref[...],
                    preferred_element_type=jnp.float32)
        y = y + b_ref[...]
        if relu:
            y = jnp.maximum(y, 0.0)
        return y

    x = x_ref[...]                              # already in compute dtype (cast in wrapper)

    enc_h1 = linear(x, w1, b1, relu=True)
    h1_ref[...] = enc_h1.astype(h1_ref.dtype)   # store-as-you-go: frees f32 live set early

    enc_h2 = linear(enc_h1, w2, b2, relu=True)
    h2_ref[...] = enc_h2.astype(h2_ref.dtype)

    enc_h3 = linear(enc_h2, w3, b3, relu=True)
    h3_ref[...] = enc_h3.astype(h3_ref.dtype)

    z = linear(enc_h3, wz, bz, relu=False)
    z_ref[...] = z.astype(z_ref.dtype)

    dec_h1 = linear(z, w4, b4, relu=True)
    dec_h2 = linear(dec_h1, w5, b5, relu=True)
    dec_h3 = linear(dec_h2, w6, b6, relu=True)
    x_bar = linear(dec_h3, wx, bx, relu=False)
    xbar_ref[...] = x_bar.astype(xbar_ref.dtype)


def _choose_tile_and_vmem(batch, p_in, p_out, compute_dtype, out_dtype):
    """Pick a batch tile (multiple of 8, <=512 rows) and a generation-aware VMEM budget."""
    c_item = jnp.dtype(compute_dtype).itemsize
    o_item = jnp.dtype(out_dtype).itemsize

    w_bytes = sum(pi * po for pi, po in zip(p_in, p_out)) * c_item    # single-buffered
    bias_bytes = sum(p_out) * 4
    out_width_sum = p_in[0] + p_out[0] + p_out[1] + p_out[2] + p_out[3]
    live_pair = max(pi + po for pi, po in zip(p_in, p_out))           # widest consecutive pair

    def footprint(tb):
        io = 2 * tb * p_in[0] * c_item + 2 * tb * out_width_sum * o_item   # double-buffered I/O
        acts = 2 * tb * live_pair * 4                                       # f32 live activations
        return w_bytes + bias_bytes + io + acts

    capacity = _vmem_capacity_bytes()
    budget = int(capacity * 0.75)           # ~96 MiB on v5e/v6e, ~48 MiB on v7x
    tb = min(512, _round_up(max(batch, 1), _SUBLANE))
    while tb > _SUBLANE and footprint(tb) > budget:
        tb = _round_up(tb // 2, _SUBLANE)
    vmem = int(min(max(footprint(tb) * 1.5, 16 * 1024 * 1024), capacity * 0.85))
    return tb, vmem


@functools.partial(jax.jit, static_argnames=("compute_dtype", "out_dtype"))
def ae_forward(x, weights, biases, *, compute_dtype=jnp.float32, out_dtype=None):
    """weights: list of 8 arrays (in, out); biases: list of 8 arrays (1, out).

    Returns (x_bar, enc_h1, enc_h2, enc_h3, z), matching the PyTorch forward.
    """
    if out_dtype is None:
        out_dtype = jnp.float32

    B, n_input = x.shape
    dims_in = [w.shape[0] for w in weights]
    dims_out = [w.shape[1] for w in weights]   # [e1, e2, e3, z, d1, d2, d3, n_input]

    p_in = [_round_up(d, _LANE) for d in dims_in]
    p_out = [_round_up(d, _LANE) for d in dims_out]

    # Zero-pad every feature axis to a multiple of 128 (exact: padded rows/cols stay 0).
    w_pad = [_pad2(w, pi, po).astype(compute_dtype)
             for w, pi, po in zip(weights, p_in, p_out)]
    b_pad = [_pad2(b, 1, po).astype(jnp.float32)
             for b, po in zip(biases, p_out)]

    tb, vmem_bytes = _choose_tile_and_vmem(B, p_in, p_out, compute_dtype, out_dtype)

    # Guarantee >= 2 grid steps so the "parallel" batch axis can shard across v7x's 2 TCs.
    if B > _SUBLANE:
        half = _round_up((_round_up(B, _SUBLANE) + 1) // 2, _SUBLANE)
        tb = min(tb, half)

    b_rows = _round_up(max(B, 1), tb)
    # Cast x to the compute dtype in the wrapper (no in-kernel round-trip; halves HBM
    # read + VMEM double-buffer on the bf16 path).
    x_p = _pad2(x, b_rows, p_in[0]).astype(compute_dtype)
    grid = (b_rows // tb,)

    out_widths = [p_in[0], p_out[0], p_out[1], p_out[2], p_out[3]]   # x_bar, h1, h2, h3, z
    out_shapes = tuple(jax.ShapeDtypeStruct((b_rows, w_), out_dtype) for w_ in out_widths)

    x_spec = pl.BlockSpec((tb, p_in[0]), lambda i: (i, 0))
    w_specs = [_resident_spec(w.shape) for w in w_pad]   # VMEM-resident, single-buffered
    b_specs = [_resident_spec(b.shape) for b in b_pad]
    out_specs = tuple(pl.BlockSpec((tb, w_), lambda i: (i, 0)) for w_ in out_widths)

    flops = 2 * b_rows * sum(pi * po for pi, po in zip(p_in, p_out))
    bytes_accessed = (x_p.size * jnp.dtype(x_p.dtype).itemsize
                      + sum(w.size * jnp.dtype(w.dtype).itemsize for w in w_pad)
                      + sum(b.size * jnp.dtype(b.dtype).itemsize for b in b_pad)
                      + sum(s.size * jnp.dtype(s.dtype).itemsize for s in out_shapes))

    outs = pl.pallas_call(
        _ae_kernel,
        out_shape=out_shapes,
        grid=grid,
        in_specs=[x_spec] + w_specs + b_specs,
        out_specs=out_specs,
        compiler_params=pltpu.CompilerParams(
            dimension_semantics=("parallel",),
            vmem_limit_bytes=vmem_bytes),
        cost_estimate=pl.CostEstimate(flops=int(flops), transcendentals=0,
                                      bytes_accessed=int(bytes_accessed)),
    )(x_p, *w_pad, *b_pad)

    x_bar_p, h1_p, h2_p, h3_p, z_p = outs
    x_bar = x_bar_p[:B, :n_input]
    enc_h1 = h1_p[:B, :dims_out[0]]
    enc_h2 = h2_p[:B, :dims_out[1]]
    enc_h3 = h3_p[:B, :dims_out[2]]
    z = z_p[:B, :dims_out[3]]
    return x_bar, enc_h1, enc_h2, enc_h3, z


def init_ae_params(key, n_enc_1, n_enc_2, n_enc_3,
                   n_dec_1, n_dec_2, n_dec_3, n_input, n_z):
    """Deterministic init mimicking nn.Linear's U(-1/sqrt(fan_in), 1/sqrt(fan_in)).

    Weights returned already transposed to (in_features, out_features)."""
    dims = [
        (n_input, n_enc_1),
        (n_enc_1, n_enc_2),
        (n_enc_2, n_enc_3),
        (n_enc_3, n_z),
        (n_z, n_dec_1),
        (n_dec_1, n_dec_2),
        (n_dec_2, n_dec_3),
        (n_dec_3, n_input),
    ]
    weights, biases = [], []
    for (fan_in, fan_out) in dims:
        key, kw, kb = jax.random.split(key, 3)
        bound = 1.0 / jnp.sqrt(jnp.float32(fan_in))
        w = jax.random.uniform(kw, (fan_in, fan_out), jnp.float32, -bound, bound)
        b = jax.random.uniform(kb, (1, fan_out), jnp.float32, -bound, bound)
        weights.append(w)
        biases.append(b)
    return weights, biases


def ae_forward_reference(x, weights, biases):
    """Pure-JAX reference of the PyTorch forward."""
    def lin(h, w, b, relu):
        y = h @ w + b
        return jnp.maximum(y, 0.0) if relu else y

    enc_h1 = lin(x, weights[0], biases[0], True)
    enc_h2 = lin(enc_h1, weights[1], biases[1], True)
    enc_h3 = lin(enc_h2, weights[2], biases[2], True)
    z = lin(enc_h3, weights[3], biases[3], False)
    dec_h1 = lin(z, weights[4], biases[4], True)
    dec_h2 = lin(dec_h1, weights[5], biases[5], True)
    dec_h3 = lin(dec_h2, weights[6], biases[6], True)
    x_bar = lin(dec_h3, weights[7], biases[7], False)
    return x_bar, enc_h1, enc_h2, enc_h3, z


if __name__ == "__main__":
    key = jax.random.PRNGKey(0)

    # Small shapes consistent with the module's forward (x is (batch, n_input)).
    # batch=32 so the padded batch splits into >=2 grid steps (exercises the pipeline).
    batch = 32
    n_input = 16
    n_enc_1, n_enc_2, n_enc_3 = 32, 32, 64
    n_dec_1, n_dec_2, n_dec_3 = 64, 32, 32
    n_z = 8

    key, kx, kp = jax.random.split(key, 3)
    x = jax.random.normal(kx, (batch, n_input), jnp.float32)
    weights, biases = init_ae_params(kp, n_enc_1, n_enc_2, n_enc_3,
                                     n_dec_1, n_dec_2, n_dec_3, n_input, n_z)

    ref = ae_forward_reference(x, weights, biases)

    # Exact-semantics path (default): f32 matmuls must match the pure-JAX reference tightly.
    outs_f32 = jax.block_until_ready(ae_forward(x, weights, biases))
    for got, want in zip(outs_f32, ref):
        assert got.shape == want.shape and got.dtype == want.dtype
        assert jnp.allclose(got, want, atol=1e-5, rtol=1e-5), "f32 mismatch vs reference"

    # Fast path (opt-in): bf16 matmuls with f32 accumulation — looser tolerance.
    outs_bf16 = jax.block_until_ready(
        ae_forward(x, weights, biases, compute_dtype=jnp.bfloat16))
    for got, want in zip(outs_bf16, ref):
        assert got.shape == want.shape
        assert jnp.allclose(got.astype(jnp.float32), want, atol=5e-2, rtol=5e-2), \
            "bf16 mismatch vs reference"

    print("KERNEL_OK")
</pallas_src>

<mosaic_0001>
module attributes {stable_mosaic.version = 11 : i64} {
  func.func @_ae_kernel(%arg0: i32, %arg1: memref<16x128xf32, #tpu.memory_space<vmem>>, %arg2: memref<128x128xf32, #tpu.memory_space<vmem>>, %arg3: memref<128x128xf32, #tpu.memory_space<vmem>>, %arg4: memref<128x128xf32, #tpu.memory_space<vmem>>, %arg5: memref<128x128xf32, #tpu.memory_space<vmem>>, %arg6: memref<128x128xf32, #tpu.memory_space<vmem>>, %arg7: memref<128x128xf32, #tpu.memory_space<vmem>>, %arg8: memref<128x128xf32, #tpu.memory_space<vmem>>, %arg9: memref<128x128xf32, #tpu.memory_space<vmem>>, %arg10: memref<1x128xf32, #tpu.memory_space<vmem>>, %arg11: memref<1x128xf32, #tpu.memory_space<vmem>>, %arg12: memref<1x128xf32, #tpu.memory_space<vmem>>, %arg13: memref<1x128xf32, #tpu.memory_space<vmem>>, %arg14: memref<1x128xf32, #tpu.memory_space<vmem>>, %arg15: memref<1x128xf32, #tpu.memory_space<vmem>>, %arg16: memref<1x128xf32, #tpu.memory_space<vmem>>, %arg17: memref<1x128xf32, #tpu.memory_space<vmem>>, %arg18: memref<16x128xf32, #tpu.memory_space<vmem>>, %arg19: memref<16x128xf32, #tpu.memory_space<vmem>>, %arg20: memref<16x128xf32, #tpu.memory_space<vmem>>, %arg21: memref<16x128xf32, #tpu.memory_space<vmem>>, %arg22: memref<16x128xf32, #tpu.memory_space<vmem>>) attributes {dimension_semantics = [#tpu.dimension_semantics<parallel>], iteration_bounds = array<i64: 2>, scalar_prefetch = 0 : i64, scratch_operands = 0 : i64, tpu.core_type = #tpu.core_type<tc>, window_params = [{transform_indices = @transform_0, window_bounds = array<i64: 16, 128>}, {pipeline_mode = #tpu.pipeline_mode<synchronous>, transform_indices = @transform_1, window_bounds = array<i64: 128, 128>}, {pipeline_mode = #tpu.pipeline_mode<synchronous>, transform_indices = @transform_2, window_bounds = array<i64: 128, 128>}, {pipeline_mode = #tpu.pipeline_mode<synchronous>, transform_indices = @transform_3, window_bounds = array<i64: 128, 128>}, {pipeline_mode = #tpu.pipeline_mode<synchronous>, transform_indices = @transform_4, window_bounds = array<i64: 128, 128>}, {pipeline_mode = #tpu.pipeline_mode<synchronous>, transform_indices = @transform_5, window_bounds = array<i64: 128, 128>}, {pipeline_mode = #tpu.pipeline_mode<synchronous>, transform_indices = @transform_6, window_bounds = array<i64: 128, 128>}, {pipeline_mode = #tpu.pipeline_mode<synchronous>, transform_indices = @transform_7, window_bounds = array<i64: 128, 128>}, {pipeline_mode = #tpu.pipeline_mode<synchronous>, transform_indices = @transform_8, window_bounds = array<i64: 128, 128>}, {pipeline_mode = #tpu.pipeline_mode<synchronous>, transform_indices = @transform_9, window_bounds = array<i64: 1, 128>}, {pipeline_mode = #tpu.pipeline_mode<synchronous>, transform_indices = @transform_10, window_bounds = array<i64: 1, 128>}, {pipeline_mode = #tpu.pipeline_mode<synchronous>, transform_indices = @transform_11, window_bounds = array<i64: 1, 128>}, {pipeline_mode = #tpu.pipeline_mode<synchronous>, transform_indices = @transform_12, window_bounds = array<i64: 1, 128>}, {pipeline_mode = #tpu.pipeline_mode<synchronous>, transform_indices = @transform_13, window_bounds = array<i64: 1, 128>}, {pipeline_mode = #tpu.pipeline_mode<synchronous>, transform_indices = @transform_14, window_bounds = array<i64: 1, 128>}, {pipeline_mode = #tpu.pipeline_mode<synchronous>, transform_indices = @transform_15, window_bounds = array<i64: 1, 128>}, {pipeline_mode = #tpu.pipeline_mode<synchronous>, transform_indices = @transform_16, window_bounds = array<i64: 1, 128>}, {transform_indices = @transform_17, window_bounds = array<i64: 16, 128>}, {transform_indices = @transform_18, window_bounds = array<i64: 16, 128>}, {transform_indices = @transform_19, window_bounds = array<i64: 16, 128>}, {transform_indices = @transform_20, window_bounds = array<i64: 16, 128>}, {transform_indices = @transform_21, window_bounds = array<i64: 16, 128>}]} {
    %c0 = arith.constant 0 : index
    %c0_0 = arith.constant 0 : index
    %0 = vector.load %arg1[%c0, %c0_0] : memref<16x128xf32, #tpu.memory_space<vmem>>, vector<16x128xf32>
    %c0_1 = arith.constant 0 : index
    %c0_2 = arith.constant 0 : index
    %1 = vector.load %arg2[%c0_1, %c0_2] : memref<128x128xf32, #tpu.memory_space<vmem>>, vector<128x128xf32>
    %cst = arith.constant dense<0.000000e+00> : vector<16x128xf32>
    %2 = tpu.matmul %0, %1, %cst {dimension_numbers = #tpu.dot_dimension_numbers<[1], [0], [0], [1], [0, 0, 1, 1], [], []>} : vector<16x128xf32>, vector<128x128xf32>, vector<16x128xf32> -> vector<16x128xf32>
    %c0_3 = arith.constant 0 : index
    %c0_4 = arith.constant 0 : index
    %3 = vector.load %arg10[%c0_3, %c0_4] : memref<1x128xf32, #tpu.memory_space<vmem>>, vector<1x128xf32>
    %4 = vector.broadcast %3 : vector<1x128xf32> to vector<16x128xf32>
    %5 = arith.addf %2, %4 : vector<16x128xf32>
    %cst_5 = arith.constant 0.000000e+00 : f32
    %6 = vector.broadcast %cst_5 : f32 to vector<16x128xf32>
    %7 = arith.maximumf %5, %6 : vector<16x128xf32>
    %c0_6 = arith.constant 0 : index
    %c0_7 = arith.constant 0 : index
    %8 = vector.load %arg19[%c0_6, %c0_7] : memref<16x128xf32, #tpu.memory_space<vmem>>, vector<16x128xf32>
    tpu.vector_store %arg19[%c0_6, %c0_7], %7 {strides = array<i32>} : memref<16x128xf32, #tpu.memory_space<vmem>>, vector<16x128xf32>,
    %c0_8 = arith.constant 0 : index
    %c0_9 = arith.constant 0 : index
    %9 = vector.load %arg3[%c0_8, %c0_9] : memref<128x128xf32, #tpu.memory_space<vmem>>, vector<128x128xf32>
    %cst_10 = arith.constant dense<0.000000e+00> : vector<16x128xf32>
    %10 = tpu.matmul %7, %9, %cst_10 {dimension_numbers = #tpu.dot_dimension_numbers<[1], [0], [0], [1], [0, 0, 1, 1], [], []>} : vector<16x128xf32>, vector<128x128xf32>, vector<16x128xf32> -> vector<16x128xf32>
    %c0_11 = arith.constant 0 : index
    %c0_12 = arith.constant 0 : index
    %11 = vector.load %arg11[%c0_11, %c0_12] : memref<1x128xf32, #tpu.memory_space<vmem>>, vector<1x128xf32>
    %12 = vector.broadcast %11 : vector<1x128xf32> to vector<16x128xf32>
    %13 = arith.addf %10, %12 : vector<16x128xf32>
    %cst_13 = arith.constant 0.000000e+00 : f32
    %14 = vector.broadcast %cst_13 : f32 to vector<16x128xf32>
    %15 = arith.maximumf %13, %14 : vector<16x128xf32>
    %c0_14 = arith.constant 0 : index
    %c0_15 = arith.constant 0 : index
    %16 = vector.load %arg20[%c0_14, %c0_15] : memref<16x128xf32, #tpu.memory_space<vmem>>, vector<16x128xf32>
    tpu.vector_store %arg20[%c0_14, %c0_15], %15 {strides = array<i32>} : memref<16x128xf32, #tpu.memory_space<vmem>>, vector<16x128xf32>,
    %c0_16 = arith.constant 0 : index
    %c0_17 = arith.constant 0 : index
    %17 = vector.load %arg4[%c0_16, %c0_17] : memref<128x128xf32, #tpu.memory_space<vmem>>, vector<128x128xf32>
    %cst_18 = arith.constant dense<0.000000e+00> : vector<16x128xf32>
    %18 = tpu.matmul %15, %17, %cst_18 {dimension_numbers = #tpu.dot_dimension_numbers<[1], [0], [0], [1], [0, 0, 1, 1], [], []>} : vector<16x128xf32>, vector<128x128xf32>, vector<16x128xf32> -> vector<16x128xf32>
    %c0_19 = arith.constant 0 : index
    %c0_20 = arith.constant 0 : index
    %19 = vector.load %arg12[%c0_19, %c0_20] : memref<1x128xf32, #tpu.memory_space<vmem>>, vector<1x128xf32>
    %20 = vector.broadcast %19 : vector<1x128xf32> to vector<16x128xf32>
    %21 = arith.addf %18, %20 : vector<16x128xf32>
    %cst_21 = arith.constant 0.000000e+00 : f32
    %22 = vector.broadcast %cst_21 : f32 to vector<16x128xf32>
    %23 = arith.maximumf %21, %22 : vector<16x128xf32>
    %c0_22 = arith.constant 0 : index
    %c0_23 = arith.constant 0 : index
    %24 = vector.load %arg21[%c0_22, %c0_23] : memref<16x128xf32, #tpu.memory_space<vmem>>, vector<16x128xf32>
    tpu.vector_store %arg21[%c0_22, %c0_23], %23 {strides = array<i32>} : memref<16x128xf32, #tpu.memory_space<vmem>>, vector<16x128xf32>,
    %c0_24 = arith.constant 0 : index
    %c0_25 = arith.constant 0 : index
    %25 = vector.load %arg5[%c0_24, %c0_25] : memref<128x128xf32, #tpu.memory_space<vmem>>, vector<128x128xf32>
    %cst_26 = arith.constant dense<0.000000e+00> : vector<16x128xf32>
    %26 = tpu.matmul %23, %25, %cst_26 {dimension_numbers = #tpu.dot_dimension_numbers<[1], [0], [0], [1], [0, 0, 1, 1], [], []>} : vector<16x128xf32>, vector<128x128xf32>, vector<16x128xf32> -> vector<16x128xf32>
    %c0_27 = arith.constant 0 : index
    %c0_28 = arith.constant 0 : index
    %27 = vector.load %arg13[%c0_27, %c0_28] : memref<1x128xf32, #tpu.memory_space<vmem>>, vector<1x128xf32>
    %28 = vector.broadcast %27 : vector<1x128xf32> to vector<16x128xf32>
    %29 = arith.addf %26, %28 : vector<16x128xf32>
    %c0_29 = arith.constant 0 : index
    %c0_30 = arith.constant 0 : index
    %30 = vector.load %arg22[%c0_29, %c0_30] : memref<16x128xf32, #tpu.memory_space<vmem>>, vector<16x128xf32>
    tpu.vector_store %arg22[%c0_29, %c0_30], %29 {strides = array<i32>} : memref<16x128xf32, #tpu.memory_space<vmem>>, vector<16x128xf32>,
    %c0_31 = arith.constant 0 : index
    %c0_32 = arith.constant 0 : index
    %31 = vector.load %arg6[%c0_31, %c0_32] : memref<128x128xf32, #tpu.memory_space<vmem>>, vector<128x128xf32>
    %cst_33 = arith.constant dense<0.000000e+00> : vector<16x128xf32>
    %32 = tpu.matmul %29, %31, %cst_33 {dimension_numbers = #tpu.dot_dimension_numbers<[1], [0], [0], [1], [0, 0, 1, 1], [], []>} : vector<16x128xf32>, vector<128x128xf32>, vector<16x128xf32> -> vector<16x128xf32>
    %c0_34 = arith.constant 0 : index
    %c0_35 = arith.constant 0 : index
    %33 = vector.load %arg14[%c0_34, %c0_35] : memref<1x128xf32, #tpu.memory_space<vmem>>, vector<1x128xf32>
    %34 = vector.broadcast %33 : vector<1x128xf32> to vector<16x128xf32>
    %35 = arith.addf %32, %34 : vector<16x128xf32>
    %cst_36 = arith.constant 0.000000e+00 : f32
    %36 = vector.broadcast %cst_36 : f32 to vector<16x128xf32>
    %37 = arith.maximumf %35, %36 : vector<16x128xf32>
    %c0_37 = arith.constant 0 : index
    %c0_38 = arith.constant 0 : index
    %38 = vector.load %arg7[%c0_37, %c0_38] : memref<128x128xf32, #tpu.memory_space<vmem>>, vector<128x128xf32>
    %cst_39 = arith.constant dense<0.000000e+00> : vector<16x128xf32>
    %39 = tpu.matmul %37, %38, %cst_39 {dimension_numbers = #tpu.dot_dimension_numbers<[1], [0], [0], [1], [0, 0, 1, 1], [], []>} : vector<16x128xf32>, vector<128x128xf32>, vector<16x128xf32> -> vector<16x128xf32>
    %c0_40 = arith.constant 0 : index
    %c0_41 = arith.constant 0 : index
    %40 = vector.load %arg15[%c0_40, %c0_41] : memref<1x128xf32, #tpu.memory_space<vmem>>, vector<1x128xf32>
    %41 = vector.broadcast %40 : vector<1x128xf32> to vector<16x128xf32>
    %42 = arith.addf %39, %41 : vector<16x128xf32>
    %cst_42 = arith.constant 0.000000e+00 : f32
    %43 = vector.broadcast %cst_42 : f32 to vector<16x128xf32>
    %44 = arith.maximumf %42, %43 : vector<16x128xf32>
    %c0_43 = arith.constant 0 : index
    %c0_44 = arith.constant 0 : index
    %45 = vector.load %arg8[%c0_43, %c0_44] : memref<128x128xf32, #tpu.memory_space<vmem>>, vector<128x128xf32>
    %cst_45 = arith.constant dense<0.000000e+00> : vector<16x128xf32>
    %46 = tpu.matmul %44, %45, %cst_45 {dimension_numbers = #tpu.dot_dimension_numbers<[1], [0], [0], [1], [0, 0, 1, 1], [], []>} : vector<16x128xf32>, vector<128x128xf32>, vector<16x128xf32> -> vector<16x128xf32>
    %c0_46 = arith.constant 0 : index
    %c0_47 = arith.constant 0 : index
    %47 = vector.load %arg16[%c0_46, %c0_47] : memref<1x128xf32, #tpu.memory_space<vmem>>, vector<1x128xf32>
    %48 = vector.broadcast %47 : vector<1x128xf32> to vector<16x128xf32>
    %49 = arith.addf %46, %48 : vector<16x128xf32>
    %cst_48 = arith.constant 0.000000e+00 : f32
    %50 = vector.broadcast %cst_48 : f32 to vector<16x128xf32>
    %51 = arith.maximumf %49, %50 : vector<16x128xf32>
    %c0_49 = arith.constant 0 : index
    %c0_50 = arith.constant 0 : index
    %52 = vector.load %arg9[%c0_49, %c0_50] : memref<128x128xf32, #tpu.memory_space<vmem>>, vector<128x128xf32>
    %cst_51 = arith.constant dense<0.000000e+00> : vector<16x128xf32>
    %53 = tpu.matmul %51, %52, %cst_51 {dimension_numbers = #tpu.dot_dimension_numbers<[1], [0], [0], [1], [0, 0, 1, 1], [], []>} : vector<16x128xf32>, vector<128x128xf32>, vector<16x128xf32> -> vector<16x128xf32>
    %c0_52 = arith.constant 0 : index
    %c0_53 = arith.constant 0 : index
    %54 = vector.load %arg17[%c0_52, %c0_53] : memref<1x128xf32, #tpu.memory_space<vmem>>, vector<1x128xf32>
    %55 = vector.broadcast %54 : vector<1x128xf32> to vector<16x128xf32>
    %56 = arith.addf %53, %55 : vector<16x128xf32>
    %c0_54 = arith.constant 0 : index
    %c0_55 = arith.constant 0 : index
    %57 = vector.load %arg18[%c0_54, %c0_55] : memref<16x128xf32, #tpu.memory_space<vmem>>, vector<16x128xf32>
    tpu.vector_store %arg18[%c0_54, %c0_55], %56 {strides = array<i32>} : memref<16x128xf32, #tpu.memory_space<vmem>>, vector<16x128xf32>,
    return
  }
  func.func @transform_0(%arg0: i32) -> (i32, i32) {
    %c0_i32 = arith.constant 0 : i32
    %c0_i32_0 = arith.constant 0 : i32
    return %arg0, %c0_i32 : i32, i32
  }
  func.func @transform_1(%arg0: i32) -> (i32, i32) {
    %c0_i32 = arith.constant 0 : i32
    %c0_i32_0 = arith.constant 0 : i32
    %c0_i32_1 = arith.constant 0 : i32
    return %c0_i32, %c0_i32_0 : i32, i32
  }
  func.func @transform_2(%arg0: i32) -> (i32, i32) {
    %c0_i32 = arith.constant 0 : i32
    %c0_i32_0 = arith.constant 0 : i32
    %c0_i32_1 = arith.constant 0 : i32
    return %c0_i32, %c0_i32_0 : i32, i32
  }
  func.func @transform_3(%arg0: i32) -> (i32, i32) {
    %c0_i32 = arith.constant 0 : i32
    %c0_i32_0 = arith.constant 0 : i32
    %c0_i32_1 = arith.constant 0 : i32
    return %c0_i32, %c0_i32_0 : i32, i32
  }
  func.func @transform_4(%arg0: i32) -> (i32, i32) {
    %c0_i32 = arith.constant 0 : i32
    %c0_i32_0 = arith.constant 0 : i32
    %c0_i32_1 = arith.constant 0 : i32
    return %c0_i32, %c0_i32_0 : i32, i32
  }
  func.func @transform_5(%arg0: i32) -> (i32, i32) {
    %c0_i32 = arith.constant 0 : i32
    %c0_i32_0 = arith.constant 0 : i32
    %c0_i32_1 = arith.constant 0 : i32
    return %c0_i32, %c0_i32_0 : i32, i32
  }
  func.func @transform_6(%arg0: i32) -> (i32, i32) {
    %c0_i32 = arith.constant 0 : i32
    %c0_i32_0 = arith.constant 0 : i32
    %c0_i32_1 = arith.constant 0 : i32
    return %c0_i32, %c0_i32_0 : i32, i32
  }
  func.func @transform_7(%arg0: i32) -> (i32, i32) {
    %c0_i32 = arith.constant 0 : i32
    %c0_i32_0 = arith.constant 0 : i32
    %c0_i32_1 = arith.constant 0 : i32
    return %c0_i32, %c0_i32_0 : i32, i32
  }
  func.func @transform_8(%arg0: i32) -> (i32, i32) {
    %c0_i32 = arith.constant 0 : i32
    %c0_i32_0 = arith.constant 0 : i32
    %c0_i32_1 = arith.constant 0 : i32
    return %c0_i32, %c0_i32_0 : i32, i32
  }
  func.func @transform_9(%arg0: i32) -> (i32, i32) {
    %c0_i32 = arith.constant 0 : i32
    %c0_i32_0 = arith.constant 0 : i32
    %c0_i32_1 = arith.constant 0 : i32
    return %c0_i32, %c0_i32_0 : i32, i32
  }
  func.func @transform_10(%arg0: i32) -> (i32, i32) {
    %c0_i32 = arith.constant 0 : i32
    %c0_i32_0 = arith.constant 0 : i32
    %c0_i32_1 = arith.constant 0 : i32
    return %c0_i32, %c0_i32_0 : i32, i32
  }
  func.func @transform_11(%arg0: i32) -> (i32, i32) {
    %c0_i32 = arith.constant 0 : i32
    %c0_i32_0 = arith.constant 0 : i32
    %c0_i32_1 = arith.constant 0 : i32
    return %c0_i32, %c0_i32_0 : i32, i32
  }
  func.func @transform_12(%arg0: i32) -> (i32, i32) {
    %c0_i32 = arith.constant 0 : i32
    %c0_i32_0 = arith.constant 0 : i32
    %c0_i32_1 = arith.constant 0 : i32
    return %c0_i32, %c0_i32_0 : i32, i32
  }
  func.func @transform_13(%arg0: i32) -> (i32, i32) {
    %c0_i32 = arith.constant 0 : i32
    %c0_i32_0 = arith.constant 0 : i32
    %c0_i32_1 = arith.constant 0 : i32
    return %c0_i32, %c0_i32_0 : i32, i32
  }
  func.func @transform_14(%arg0: i32) -> (i32, i32) {
    %c0_i32 = arith.constant 0 : i32
    %c0_i32_0 = arith.constant 0 : i32
    %c0_i32_1 = arith.constant 0 : i32
    return %c0_i32, %c0_i32_0 : i32, i32
  }
  func.func @transform_15(%arg0: i32) -> (i32, i32) {
    %c0_i32 = arith.constant 0 : i32
    %c0_i32_0 = arith.constant 0 : i32
    %c0_i32_1 = arith.constant 0 : i32
    return %c0_i32, %c0_i32_0 : i32, i32
  }
  func.func @transform_16(%arg0: i32) -> (i32, i32) {
    %c0_i32 = arith.constant 0 : i32
    %c0_i32_0 = arith.constant 0 : i32
    %c0_i32_1 = arith.constant 0 : i32
    return %c0_i32, %c0_i32_0 : i32, i32
  }
  func.func @transform_17(%arg0: i32) -> (i32, i32) {
    %c0_i32 = arith.constant 0 : i32
    %c0_i32_0 = arith.constant 0 : i32
    return %arg0, %c0_i32 : i32, i32
  }
  func.func @transform_18(%arg0: i32) -> (i32, i32) {
    %c0_i32 = arith.constant 0 : i32
    %c0_i32_0 = arith.constant 0 : i32
    return %arg0, %c0_i32 : i32, i32
  }
  func.func @transform_19(%arg0: i32) -> (i32, i32) {
    %c0_i32 = arith.constant 0 : i32
    %c0_i32_0 = arith.constant 0 : i32
    return %arg0, %c0_i32 : i32, i32
  }
  func.func @transform_20(%arg0: i32) -> (i32, i32) {
    %c0_i32 = arith.constant 0 : i32
    %c0_i32_0 = arith.constant 0 : i32
    return %arg0, %c0_i32 : i32, i32
  }
  func.func @transform_21(%arg0: i32) -> (i32, i32) {
    %c0_i32 = arith.constant 0 : i32
    %c0_i32_0 = arith.constant 0 : i32
    return %arg0, %c0_i32 : i32, i32
  }
}

</mosaic_0001>

<llo_original>
// kernel: ae_forward.1
$region0: #{ae_forward.1}
  #allocation0 [shape = 'u32[]', space=smem, size = 0x4, offset = 0x4, fixed_abs, tag = 'smem constant byte address 0x4 - core index']
  #allocation1 [shape = 'u32[72,128]{1,0:T(1,128)}', space=vmem, size = 0x9000, scoped, tag = 'internal scratch']
  %s0 = inlined_call_operand.vmem [shape: f32[32,128], index: 0, kind: input, shape index: {}]
  %s1 = inlined_call_operand.vmem [shape: f32[128,128], index: 1, kind: input, shape index: {}]
  %s2 = inlined_call_operand.vmem [shape: f32[128,128], index: 2, kind: input, shape index: {}]
  %s3 = inlined_call_operand.vmem [shape: f32[128,128], index: 3, kind: input, shape index: {}]
  %s4 = inlined_call_operand.vmem [shape: f32[128,128], index: 4, kind: input, shape index: {}]
  %s5 = inlined_call_operand.vmem [shape: f32[128,128], index: 5, kind: input, shape index: {}]
  %s6 = inlined_call_operand.vmem [shape: f32[128,128], index: 6, kind: input, shape index: {}]
  %s7 = inlined_call_operand.vmem [shape: f32[128,128], index: 7, kind: input, shape index: {}]
  %s8 = inlined_call_operand.vmem [shape: f32[128,128], index: 8, kind: input, shape index: {}]
  %s9 = inlined_call_operand.vmem [shape: f32[1,128], index: 9, kind: input, shape index: {}]
  %s10 = inlined_call_operand.vmem [shape: f32[1,128], index: 10, kind: input, shape index: {}]
  %s11 = inlined_call_operand.vmem [shape: f32[1,128], index: 11, kind: input, shape index: {}]
  %s12 = inlined_call_operand.vmem [shape: f32[1,128], index: 12, kind: input, shape index: {}]
  %s13 = inlined_call_operand.vmem [shape: f32[1,128], index: 13, kind: input, shape index: {}]
  %s14 = inlined_call_operand.vmem [shape: f32[1,128], index: 14, kind: input, shape index: {}]
  %s15 = inlined_call_operand.vmem [shape: f32[1,128], index: 15, kind: input, shape index: {}]
  %s16 = inlined_call_operand.vmem [shape: f32[1,128], index: 16, kind: input, shape index: {}]
  %s17 = inlined_call_operand.vmem [shape: f32[32,128], index: 17, kind: output, shape index: {0}]
  %s18 = inlined_call_operand.hbm [shape: f32[32,128], index: 18, kind: output, shape index: {1}]
  %s19 = inlined_call_operand.hbm [shape: f32[32,128], index: 19, kind: output, shape index: {2}]
  %s20 = inlined_call_operand.hbm [shape: f32[32,128], index: 20, kind: output, shape index: {3}]
  %s21 = inlined_call_operand.vmem [shape: f32[32,128], index: 21, kind: output, shape index: {4}]
  %22 = xla_tuple %s17, %s18, %s19, %s20, %s21
  %s23 = sld [smem:[#allocation0]]
  $region133: #{ae_forward.1} parent=0
    _
  %s25 = ssub.s32 1, %s23
  %s26 = scalar_select 0, %s25, %s23
  $region1: #{ae_forward.1} parent=0
    #allocation2 [shape = 'u8[16384]{0}', space=vmem, size = 0x4000, scoped, tag = 'output window, operand 1']
    #allocation3 [shape = 's32[2]{0}', space=sflag, size = 0x8, scoped, tag = 'scoped memory for ae_forward.1']
    #allocation4 [shape = 'u8[16384]{0}', space=vmem, size = 0x4000, scoped, tag = 'output window, operand 2']
    #allocation5 [shape = 's32[2]{0}', space=sflag, size = 0x8, scoped, tag = 'scoped memory for ae_forward.1']
    #allocation6 [shape = 'u8[16384]{0}', space=vmem, size = 0x4000, scoped, tag = 'output window, operand 3']
    %27 = vsyncpa [#allocation3], 0
    %s28 = scalar_lea.sflag [#allocation3], 1
    %29 = vsyncpa %s28, 0
    %30 = vsyncpa [#allocation5], 0
    %s31 = scalar_lea.sflag [#allocation5], 1
    %32 = vsyncpa %s31, 0
    loop: start=0, step=1, limit=4
    $region2: #{ae_forward.1} parent=1 // loop_pre_header
      _
    $region3: #{ae_forward.1} parent=1 // loop_header
      %s34 = sphi 0, %s38
      %p35 = scmp.ge.s32.totalorder %s34, 4
      %s44 = sphi 0, %s46
      %s47 = sphi 0, %s44
      %s48 = sphi 0, %s47
      %s64 = sphi 0, %s48
      %s68 = sphi 0, %s68
      %s70 = sphi 0, %s68
      %s71 = sphi 0, %s70
      %s85 = sphi 0, %s71
      %s89 = sphi 0, %s89
      %s91 = sphi 0, %s89
      %s92 = sphi 0, %s91
      %s106 = sphi 0, %s92
      %s110 = sphi 0, %s110
      %s112 = sphi 0, %s110
      %s113 = sphi 0, %s112
      %s127 = sphi 0, %s113
      %s131 = sphi 0, %s131
      %s133 = sphi 0, %s131
      %s134 = sphi 0, %s133
      %s148 = sphi 0, %s134
      %s152 = sphi 0, %s152
      %s154 = sphi 0, %s152
      %s155 = sphi 0, %s154
      %s169 = sphi 0, %s155
      %s173 = sphi 0, %s173
      %s175 = sphi 0, %s173
      %s176 = sphi 0, %s175
      %s190 = sphi 0, %s176
      %s194 = sphi 0, %s194
      %s196 = sphi 0, %s194
      %s197 = sphi 0, %s196
      %s211 = sphi 0, %s197
      %s215 = sphi 0, %s215
      %s217 = sphi 0, %s215
      %s218 = sphi 0, %s217
      %s232 = sphi 0, %s218
      %s236 = sphi 0, %s236
      %s238 = sphi 0, %s236
      %s239 = sphi 0, %s238
      %s253 = sphi 0, %s239
      %s257 = sphi 0, %s257
      %s259 = sphi 0, %s257
      %s260 = sphi 0, %s259
      %s274 = sphi 0, %s260
      %s278 = sphi 0, %s278
      %s280 = sphi 0, %s278
      %s281 = sphi 0, %s280
      %s295 = sphi 0, %s281
      %s299 = sphi 0, %s299
      %s301 = sphi 0, %s299
      %s302 = sphi 0, %s301
      %s316 = sphi 0, %s302
      %s320 = sphi 0, %s320
      %s322 = sphi 0, %s320
      %s323 = sphi 0, %s322
      %s337 = sphi 0, %s323
      %s341 = sphi 0, %s341
      %s343 = sphi 0, %s341
      %s344 = sphi 0, %s343
      %s358 = sphi 0, %s344
      %s362 = sphi 0, %s362
      %s364 = sphi 0, %s362
      %s365 = sphi 0, %s364
      %s379 = sphi 0, %s365
      %s383 = sphi 0, %s383
      %s385 = sphi 0, %s383
      %s386 = sphi 0, %s385
      %s400 = sphi 0, %s386
      %s406 = sphi 0, %s408
      %s409 = sphi 0, %s406
      %s410 = sphi 0, %s409
      %s426 = sphi 0, %s410
      %s432 = sphi 0, %s434
      %s435 = sphi 0, %s432
      %s436 = sphi 0, %s435
      %s452 = sphi 0, %s436
      %s458 = sphi 0, %s460
      %s461 = sphi 0, %s458
      %s462 = sphi 0, %s461
      %s478 = sphi 0, %s462
      %s484 = sphi 0, %s486
      %s487 = sphi 0, %s484
      %s488 = sphi 0, %s487
      %s504 = sphi 0, %s488
      %s510 = sphi 0, %s512
      %s513 = sphi 0, %s510
      %s514 = sphi 0, %s513
      %s530 = sphi 0, %s514
    $region4: #{ae_forward.1} parent=1 // loop_header_branch
      %37 = sbr.rel (%p35) target = $region8
    $region5: #{ae_forward.1} parent=1 // loop_body
      %s39 = ssub.s32 %s34, 1
      %s40 = ssub.s32 %s34, 2
      %s41 = sadd.s32 %s34, 1
      %s42 = ssub.s32 %s34, %s41
      %p43 = scmp.eq.s32.totalorder %s42, 0
      %s45 = sadd.s32 %s44, 1
      %s46 = scalar_select %p43, %s44, %s45
      %p49 = pneg %p43
      %p50 = scmp.eq.s32.totalorder %s34, 1
      %p51 = por %p49, %p50
      %p52 = scmp.ne.s32.totalorder %s44, %s47
      %p53 = scmp.eq.s32.totalorder %s34, 0
      %p54 = por %p52, %p53
      %p55 = scmp.ne.s32.totalorder %s44, %s47
      %p56 = scmp.eq.s32.totalorder %s39, 1
      %p57 = por %p55, %p56
      %p58 = scmp.ne.s32.totalorder %s47, %s48
      %p59 = scmp.eq.s32.totalorder %s39, 0
      %p60 = por %p58, %p59
      %p61 = scmp.ne.s32.totalorder %s47, %s48
      %p62 = scmp.eq.s32.totalorder %s40, 1
      %p63 = por %p61, %p62
      %p65 = scmp.ne.s32.totalorder %s48, %s64
      %p66 = scmp.eq.s32.totalorder %s40, 0
      %p67 = por %p65, %p66
      %s69 = sadd.s32 %s68, 1
      %p72 = scmp.eq.s32.totalorder %s34, 1
      %p73 = scmp.ne.s32.totalorder %s68, %s70
      %p74 = scmp.eq.s32.totalorder %s34, 0
      %p75 = por %p73, %p74
      %p76 = scmp.ne.s32.totalorder %s68, %s70
      %p77 = scmp.eq.s32.totalorder %s39, 1
      %p78 = por %p76, %p77
      %p79 = scmp.ne.s32.totalorder %s70, %s71
      %p80 = scmp.eq.s32.totalorder %s39, 0
      %p81 = por %p79, %p80
      %p82 = scmp.ne.s32.totalorder %s70, %s71
      %p83 = scmp.eq.s32.totalorder %s40, 1
      %p84 = por %p82, %p83
      %p86 = scmp.ne.s32.totalorder %s71, %s85
      %p87 = scmp.eq.s32.totalorder %s40, 0
      %p88 = por %p86, %p87
      %s90 = sadd.s32 %s89, 1
      %p93 = scmp.eq.s32.totalorder %s34, 1
      %p94 = scmp.ne.s32.totalorder %s89, %s91
      %p95 = scmp.eq.s32.totalorder %s34, 0
      %p96 = por %p94, %p95
      %p97 = scmp.ne.s32.totalorder %s89, %s91
      %p98 = scmp.eq.s32.totalorder %s39, 1
      %p99 = por %p97, %p98
      %p100 = scmp.ne.s32.totalorder %s91, %s92
      %p101 = scmp.eq.s32.totalorder %s39, 0
      %p102 = por %p100, %p101
      %p103 = scmp.ne.s32.totalorder %s91, %s92
      %p104 = scmp.eq.s32.totalorder %s40, 1
      %p105 = por %p103, %p104
      %p107 = scmp.ne.s32.totalorder %s92, %s106
      %p108 = scmp.eq.s32.totalorder %s40, 0
      %p109 = por %p107, %p108
      %s111 = sadd.s32 %s110, 1
      %p114 = scmp.eq.s32.totalorder %s34, 1
      %p115 = scmp.ne.s32.totalorder %s110, %s112
      %p116 = scmp.eq.s32.totalorder %s34, 0
      %p117 = por %p115, %p116
      %p118 = scmp.ne.s32.totalorder %s110, %s112
      %p119 = scmp.eq.s32.totalorder %s39, 1
      %p120 = por %p118, %p119
      %p121 = scmp.ne.s32.totalorder %s112, %s113
      %p122 = scmp.eq.s32.totalorder %s39, 0
      %p123 = por %p121, %p122
      %p124 = scmp.ne.s32.totalorder %s112, %s113
      %p125 = scmp.eq.s32.totalorder %s40, 1
      %p126 = por %p124, %p125
      %p128 = scmp.ne.s32.totalorder %s113, %s127
      %p129 = scmp.eq.s32.totalorder %s40, 0
      %p130 = por %p128, %p129
      %s132 = sadd.s32 %s131, 1
      %p135 = scmp.eq.s32.totalorder %s34, 1
      %p136 = scmp.ne.s32.totalorder %s131, %s133
      %p137 = scmp.eq.s32.totalorder %s34, 0
      %p138 = por %p136, %p137
      %p139 = scmp.ne.s32.totalorder %s131, %s133
      %p140 = scmp.eq.s32.totalorder %s39, 1
      %p141 = por %p139, %p140
      %p142 = scmp.ne.s32.totalorder %s133, %s134
      %p143 = scmp.eq.s32.totalorder %s39, 0
      %p144 = por %p142, %p143
      %p145 = scmp.ne.s32.totalorder %s133, %s134
      %p146 = scmp.eq.s32.totalorder %s40, 1
      %p147 = por %p145, %p146
      %p149 = scmp.ne.s32.totalorder %s134, %s148
      %p150 = scmp.eq.s32.totalorder %s40, 0
      %p151 = por %p149, %p150
      %s153 = sadd.s32 %s152, 1
      %p156 = scmp.eq.s32.totalorder %s34, 1
      %p157 = scmp.ne.s32.totalorder %s152, %s154
      %p158 = scmp.eq.s32.totalorder %s34, 0
      %p159 = por %p157, %p158
      %p160 = scmp.ne.s32.totalorder %s152, %s154
      %p161 = scmp.eq.s32.totalorder %s39, 1
      %p162 = por %p160, %p161
      %p163 = scmp.ne.s32.totalorder %s154, %s155
      %p164 = scmp.eq.s32.totalorder %s39, 0
      %p165 = por %p163, %p164
      %p166 = scmp.ne.s32.totalorder %s154, %s155
      %p167 = scmp.eq.s32.totalorder %s40, 1
      %p168 = por %p166, %p167
      %p170 = scmp.ne.s32.totalorder %s155, %s169
      %p171 = scmp.eq.s32.totalorder %s40, 0
      %p172 = por %p170, %p171
      %s174 = sadd.s32 %s173, 1
      %p177 = scmp.eq.s32.totalorder %s34, 1
      %p178 = scmp.ne.s32.totalorder %s173, %s175
      %p179 = scmp.eq.s32.totalorder %s34, 0
      %p180 = por %p178, %p179
      %p181 = scmp.ne.s32.totalorder %s173, %s175
      %p182 = scmp.eq.s32.totalorder %s39, 1
      %p183 = por %p181, %p182
      %p184 = scmp.ne.s32.totalorder %s175, %s176
      %p185 = scmp.eq.s32.totalorder %s39, 0
      %p186 = por %p184, %p185
      %p187 = scmp.ne.s32.totalorder %s175, %s176
      %p188 = scmp.eq.s32.totalorder %s40, 1
      %p189 = por %p187, %p188
      %p191 = scmp.ne.s32.totalorder %s176, %s190
      %p192 = scmp.eq.s32.totalorder %s40, 0
      %p193 = por %p191, %p192
      %s195 = sadd.s32 %s194, 1
      %p198 = scmp.eq.s32.totalorder %s34, 1
      %p199 = scmp.ne.s32.totalorder %s194, %s196
      %p200 = scmp.eq.s32.totalorder %s34, 0
      %p201 = por %p199, %p200
      %p202 = scmp.ne.s32.totalorder %s194, %s196
      %p203 = scmp.eq.s32.totalorder %s39, 1
      %p204 = por %p202, %p203
      %p205 = scmp.ne.s32.totalorder %s196, %s197
      %p206 = scmp.eq.s32.totalorder %s39, 0
      %p207 = por %p205, %p206
      %p208 = scmp.ne.s32.totalorder %s196, %s197
      %p209 = scmp.eq.s32.totalorder %s40, 1
      %p210 = por %p208, %p209
      %p212 = scmp.ne.s32.totalorder %s197, %s211
      %p213 = scmp.eq.s32.totalorder %s40, 0
      %p214 = por %p212, %p213
      %s216 = sadd.s32 %s215, 1
      %p219 = scmp.eq.s32.totalorder %s34, 1
      %p220 = scmp.ne.s32.totalorder %s215, %s217
      %p221 = scmp.eq.s32.totalorder %s34, 0
      %p222 = por %p220, %p221
      %p223 = scmp.ne.s32.totalorder %s215, %s217
      %p224 = scmp.eq.s32.totalorder %s39, 1
      %p225 = por %p223, %p224
      %p226 = scmp.ne.s32.totalorder %s217, %s218
      %p227 = scmp.eq.s32.totalorder %s39, 0
      %p228 = por %p226, %p227
      %p229 = scmp.ne.s32.totalorder %s217, %s218
      %p230 = scmp.eq.s32.totalorder %s40, 1
      %p231 = por %p229, %p230
      %p233 = scmp.ne.s32.totalorder %s218, %s232
      %p234 = scmp.eq.s32.totalorder %s40, 0
      %p235 = por %p233, %p234
      %s237 = sadd.s32 %s236, 1
      %p240 = scmp.eq.s32.totalorder %s34, 1
      %p241 = scmp.ne.s32.totalorder %s236, %s238
      %p242 = scmp.eq.s32.totalorder %s34, 0
      %p243 = por %p241, %p242
      %p244 = scmp.ne.s32.totalorder %s236, %s238
      %p245 = scmp.eq.s32.totalorder %s39, 1
      %p246 = por %p244, %p245
      %p247 = scmp.ne.s32.totalorder %s238, %s239
      %p248 = scmp.eq.s32.totalorder %s39, 0
      %p249 = por %p247, %p248
      %p250 = scmp.ne.s32.totalorder %s238, %s239
      %p251 = scmp.eq.s32.totalorder %s40, 1
      %p252 = por %p250, %p251
      %p254 = scmp.ne.s32.totalorder %s239, %s253
      %p255 = scmp.eq.s32.totalorder %s40, 0
      %p256 = por %p254, %p255
      %s258 = sadd.s32 %s257, 1
      %p261 = scmp.eq.s32.totalorder %s34, 1
      %p262 = scmp.ne.s32.totalorder %s257, %s259
      %p263 = scmp.eq.s32.totalorder %s34, 0
      %p264 = por %p262, %p263
      %p265 = scmp.ne.s32.totalorder %s257, %s259
      %p266 = scmp.eq.s32.totalorder %s39, 1
      %p267 = por %p265, %p266
      %p268 = scmp.ne.s32.totalorder %s259, %s260
      %p269 = scmp.eq.s32.totalorder %s39, 0
      %p270 = por %p268, %p269
      %p271 = scmp.ne.s32.totalorder %s259, %s260
      %p272 = scmp.eq.s32.totalorder %s40, 1
      %p273 = por %p271, %p272
      %p275 = scmp.ne.s32.totalorder %s260, %s274
      %p276 = scmp.eq.s32.totalorder %s40, 0
      %p277 = por %p275, %p276
      %s279 = sadd.s32 %s278, 1
      %p282 = scmp.eq.s32.totalorder %s34, 1
      %p283 = scmp.ne.s32.totalorder %s278, %s280
      %p284 = scmp.eq.s32.totalorder %s34, 0
      %p285 = por %p283, %p284
      %p286 = scmp.ne.s32.totalorder %s278, %s280
      %p287 = scmp.eq.s32.totalorder %s39, 1
      %p288 = por %p286, %p287
      %p289 = scmp.ne.s32.totalorder %s280, %s281
      %p290 = scmp.eq.s32.totalorder %s39, 0
      %p291 = por %p289, %p290
      %p292 = scmp.ne.s32.totalorder %s280, %s281
      %p293 = scmp.eq.s32.totalorder %s40, 1
      %p294 = por %p292, %p293
      %p296 = scmp.ne.s32.totalorder %s281, %s295
      %p297 = scmp.eq.s32.totalorder %s40, 0
      %p298 = por %p296, %p297
      %s300 = sadd.s32 %s299, 1
      %p303 = scmp.eq.s32.totalorder %s34, 1
      %p304 = scmp.ne.s32.totalorder %s299, %s301
      %p305 = scmp.eq.s32.totalorder %s34, 0
      %p306 = por %p304, %p305
      %p307 = scmp.ne.s32.totalorder %s299, %s301
      %p308 = scmp.eq.s32.totalorder %s39, 1
      %p309 = por %p307, %p308
      %p310 = scmp.ne.s32.totalorder %s301, %s302
      %p311 = scmp.eq.s32.totalorder %s39, 0
      %p312 = por %p310, %p311
      %p313 = scmp.ne.s32.totalorder %s301, %s302
      %p314 = scmp.eq.s32.totalorder %s40, 1
      %p315 = por %p313, %p314
      %p317 = scmp.ne.s32.totalorder %s302, %s316
      %p318 = scmp.eq.s32.totalorder %s40, 0
      %p319 = por %p317, %p318
      %s321 = sadd.s32 %s320, 1
      %p324 = scmp.eq.s32.totalorder %s34, 1
      %p325 = scmp.ne.s32.totalorder %s320, %s322
      %p326 = scmp.eq.s32.totalorder %s34, 0
      %p327 = por %p325, %p326
      %p328 = scmp.ne.s32.totalorder %s320, %s322
      %p329 = scmp.eq.s32.totalorder %s39, 1
      %p330 = por %p328, %p329
      %p331 = scmp.ne.s32.totalorder %s322, %s323
      %p332 = scmp.eq.s32.totalorder %s39, 0
      %p333 = por %p331, %p332
      %p334 = scmp.ne.s32.totalorder %s322, %s323
      %p335 = scmp.eq.s32.totalorder %s40, 1
      %p336 = por %p334, %p335
      %p338 = scmp.ne.s32.totalorder %s323, %s337
      %p339 = scmp.eq.s32.totalorder %s40, 0
      %p340 = por %p338, %p339
      %s342 = sadd.s32 %s341, 1
      %p345 = scmp.eq.s32.totalorder %s34, 1
      %p346 = scmp.ne.s32.totalorder %s341, %s343
      %p347 = scmp.eq.s32.totalorder %s34, 0
      %p348 = por %p346, %p347
      %p349 = scmp.ne.s32.totalorder %s341, %s343
      %p350 = scmp.eq.s32.totalorder %s39, 1
      %p351 = por %p349, %p350
      %p352 = scmp.ne.s32.totalorder %s343, %s344
      %p353 = scmp.eq.s32.totalorder %s39, 0
      %p354 = por %p352, %p353
      %p355 = scmp.ne.s32.totalorder %s343, %s344
      %p356 = scmp.eq.s32.totalorder %s40, 1
      %p357 = por %p355, %p356
      %p359 = scmp.ne.s32.totalorder %s344, %s358
      %p360 = scmp.eq.s32.totalorder %s40, 0
      %p361 = por %p359, %p360
      %s363 = sadd.s32 %s362, 1
      %p366 = scmp.eq.s32.totalorder %s34, 1
      %p367 = scmp.ne.s32.totalorder %s362, %s364
      %p368 = scmp.eq.s32.totalorder %s34, 0
      %p369 = por %p367, %p368
      %p370 = scmp.ne.s32.totalorder %s362, %s364
      %p371 = scmp.eq.s32.totalorder %s39, 1
      %p372 = por %p370, %p371
      %p373 = scmp.ne.s32.totalorder %s364, %s365
      %p374 = scmp.eq.s32.totalorder %s39, 0
      %p375 = por %p373, %p374
      %p376 = scmp.ne.s32.totalorder %s364, %s365
      %p377 = scmp.eq.s32.totalorder %s40, 1
      %p378 = por %p376, %p377
      %p380 = scmp.ne.s32.totalorder %s365, %s379
      %p381 = scmp.eq.s32.totalorder %s40, 0
      %p382 = por %p380, %p381
      %s384 = sadd.s32 %s383, 1
      %p387 = scmp.eq.s32.totalorder %s34, 1
      %p388 = scmp.ne.s32.totalorder %s383, %s385
      %p389 = scmp.eq.s32.totalorder %s34, 0
      %p390 = por %p388, %p389
      %p391 = scmp.ne.s32.totalorder %s383, %s385
      %p392 = scmp.eq.s32.totalorder %s39, 1
      %p393 = por %p391, %p392
      %p394 = scmp.ne.s32.totalorder %s385, %s386
      %p395 = scmp.eq.s32.totalorder %s39, 0
      %p396 = por %p394, %p395
      %p397 = scmp.ne.s32.totalorder %s385, %s386
      %p398 = scmp.eq.s32.totalorder %s40, 1
      %p399 = por %p397, %p398
      %p401 = scmp.ne.s32.totalorder %s386, %s400
      %p402 = scmp.eq.s32.totalorder %s40, 0
      %p403 = por %p401, %p402
      %s404 = ssub.s32 %s34, %s41
      %p405 = scmp.eq.s32.totalorder %s404, 0
      %s407 = sadd.s32 %s406, 1
      %s408 = scalar_select %p405, %s406, %s407
      %p411 = pneg %p405
      %p412 = scmp.eq.s32.totalorder %s34, 1
      %p413 = por %p411, %p412
      %p414 = scmp.ne.s32.totalorder %s406, %s409
      %p415 = scmp.eq.s32.totalorder %s34, 0
      %p416 = por %p414, %p415
      %p417 = scmp.ne.s32.totalorder %s406, %s409
      %p418 = scmp.eq.s32.totalorder %s39, 1
      %p419 = por %p417, %p418
      %p420 = scmp.ne.s32.totalorder %s409, %s410
      %p421 = scmp.eq.s32.totalorder %s39, 0
      %p422 = por %p420, %p421
      %p423 = scmp.ne.s32.totalorder %s409, %s410
      %p424 = scmp.eq.s32.totalorder %s40, 1
      %p425 = por %p423, %p424
      %p427 = scmp.ne.s32.totalorder %s410, %s426
      %p428 = scmp.eq.s32.totalorder %s40, 0
      %p429 = por %p427, %p428
      %s430 = ssub.s32 %s34, %s41
      %p431 = scmp.eq.s32.totalorder %s430, 0
      %s433 = sadd.s32 %s432, 1
      %s434 = scalar_select %p431, %s432, %s433
      %p437 = pneg %p431
      %p438 = scmp.eq.s32.totalorder %s34, 1
      %p439 = por %p437, %p438
      %p440 = scmp.ne.s32.totalorder %s432, %s435
      %p441 = scmp.eq.s32.totalorder %s34, 0
      %p442 = por %p440, %p441
      %p443 = scmp.ne.s32.totalorder %s432, %s435
      %p444 = scmp.eq.s32.totalorder %s39, 1
      %p445 = por %p443, %p444
      %p446 = scmp.ne.s32.totalorder %s435, %s436
      %p447 = scmp.eq.s32.totalorder %s39, 0
      %p448 = por %p446, %p447
      %p449 = scmp.ne.s32.totalorder %s435, %s436
      %p450 = scmp.eq.s32.totalorder %s40, 1
      %p451 = por %p449, %p450
      %p453 = scmp.ne.s32.totalorder %s436, %s452
      %p454 = scmp.eq.s32.totalorder %s40, 0
      %p455 = por %p453, %p454
      %s456 = ssub.s32 %s34, %s41
      %p457 = scmp.eq.s32.totalorder %s456, 0
      %s459 = sadd.s32 %s458, 1
      %s460 = scalar_select %p457, %s458, %s459
      %p463 = pneg %p457
      %p464 = scmp.eq.s32.totalorder %s34, 1
      %p465 = por %p463, %p464
      %p466 = scmp.ne.s32.totalorder %s458, %s461
      %p467 = scmp.eq.s32.totalorder %s34, 0
      %p468 = por %p466, %p467
      %p469 = scmp.ne.s32.totalorder %s458, %s461
      %p470 = scmp.eq.s32.totalorder %s39, 1
      %p471 = por %p469, %p470
      %p472 = scmp.ne.s32.totalorder %s461, %s462
      %p473 = scmp.eq.s32.totalorder %s39, 0
      %p474 = por %p472, %p473
      %p475 = scmp.ne.s32.totalorder %s461, %s462
      %p476 = scmp.eq.s32.totalorder %s40, 1
      %p477 = por %p475, %p476
      %p479 = scmp.ne.s32.totalorder %s462, %s478
      %p480 = scmp.eq.s32.totalorder %s40, 0
      %p481 = por %p479, %p480
      %s482 = ssub.s32 %s34, %s41
      %p483 = scmp.eq.s32.totalorder %s482, 0
      %s485 = sadd.s32 %s484, 1
      %s486 = scalar_select %p483, %s484, %s485
      %p489 = pneg %p483
      %p490 = scmp.eq.s32.totalorder %s34, 1
      %p491 = por %p489, %p490
      %p492 = scmp.ne.s32.totalorder %s484, %s487
      %p493 = scmp.eq.s32.totalorder %s34, 0
      %p494 = por %p492, %p493
      %p495 = scmp.ne.s32.totalorder %s484, %s487
      %p496 = scmp.eq.s32.totalorder %s39, 1
      %p497 = por %p495, %p496
      %p498 = scmp.ne.s32.totalorder %s487, %s488
      %p499 = scmp.eq.s32.totalorder %s39, 0
      %p500 = por %p498, %p499
      %p501 = scmp.ne.s32.totalorder %s487, %s488
      %p502 = scmp.eq.s32.totalorder %s40, 1
      %p503 = por %p501, %p502
      %p505 = scmp.ne.s32.totalorder %s488, %s504
      %p506 = scmp.eq.s32.totalorder %s40, 0
      %p507 = por %p505, %p506
      %s508 = ssub.s32 %s34, %s41
      %p509 = scmp.eq.s32.totalorder %s508, 0
      %s511 = sadd.s32 %s510, 1
      %s512 = scalar_select %p509, %s510, %s511
      %p515 = pneg %p509
      %p516 = scmp.eq.s32.totalorder %s34, 1
      %p517 = por %p515, %p516
      %p518 = scmp.ne.s32.totalorder %s510, %s513
      %p519 = scmp.eq.s32.totalorder %s34, 0
      %p520 = por %p518, %p519
      %p521 = scmp.ne.s32.totalorder %s510, %s513
      %p522 = scmp.eq.s32.totalorder %s39, 1
      %p523 = por %p521, %p522
      %p524 = scmp.ne.s32.totalorder %s513, %s514
      %p525 = scmp.eq.s32.totalorder %s39, 0
      %p526 = por %p524, %p525
      %p527 = scmp.ne.s32.totalorder %s513, %s514
      %p528 = scmp.eq.s32.totalorder %s40, 1
      %p529 = por %p527, %p528
      %p531 = scmp.ne.s32.totalorder %s514, %s530
      %p532 = scmp.eq.s32.totalorder %s40, 0
      %p533 = por %p531, %p532
      %p534 = scmp.le.s32.totalorder 1, %s34
      %p535 = scmp.lt.s32.totalorder %s34, 3
      %p536 = pnand %p534, %p535
      %p537 = pneg %p536
      // Predicated region
      $region9: #{ae_forward.1} parent=5 // pred_check
        _
      $region10: #{ae_forward.1} parent=5 // pred_check_branch
        %539 = sbr.rel (%p536) target = $region12
      $region11: #{ae_forward.1} parent=5 // pred_region
        %s540 = ssub.s32 %s34, 1
        // Predicated region
        $region13: #{ae_forward.1} parent=11 // pred_check
          %p541 = pneg %p81
        $region14: #{ae_forward.1} parent=11 // pred_check_branch
          %543 = sbr.rel (%p541) target = $region16
        $region15: #{ae_forward.1} parent=11 // pred_region
          _
        $region16: #{ae_forward.1} parent=11 // pred_fallthru
          _
        // Predicated region
        $region17: #{ae_forward.1} parent=11 // pred_check
          %p544 = pneg %p102
        $region18: #{ae_forward.1} parent=11 // pred_check_branch
          %546 = sbr.rel (%p544) target = $region20
        $region19: #{ae_forward.1} parent=11 // pred_region
          _
        $region20: #{ae_forward.1} parent=11 // pred_fallthru
          _
        // Predicated region
        $region21: #{ae_forward.1} parent=11 // pred_check
          %p547 = pneg %p123
        $region22: #{ae_forward.1} parent=11 // pred_check_branch
          %549 = sbr.rel (%p547) target = $region24
        $region23: #{ae_forward.1} parent=11 // pred_region
          _
        $region24: #{ae_forward.1} parent=11 // pred_fallthru
          _
        // Predicated region
        $region25: #{ae_forward.1} parent=11 // pred_check
          %p550 = pneg %p144
        $region26: #{ae_forward.1} parent=11 // pred_check_branch
          %552 = sbr.rel (%p550) target = $region28
        $region27: #{ae_forward.1} parent=11 // pred_region
          _
        $region28: #{ae_forward.1} parent=11 // pred_fallthru
          _
        // Predicated region
        $region29: #{ae_forward.1} parent=11 // pred_check
          %p553 = pneg %p165
        $region30: #{ae_forward.1} parent=11 // pred_check_branch
          %555 = sbr.rel (%p553) target = $region32
        $region31: #{ae_forward.1} parent=11 // pred_region
          _
        $region32: #{ae_forward.1} parent=11 // pred_fallthru
          _
        // Predicated region
        $region33: #{ae_forward.1} parent=11 // pred_check
          %p556 = pneg %p186
        $region34: #{ae_forward.1} parent=11 // pred_check_branch
          %558 = sbr.rel (%p556) target = $region36
        $region35: #{ae_forward.1} parent=11 // pred_region
          _
        $region36: #{ae_forward.1} parent=11 // pred_fallthru
          _
        // Predicated region
        $region37: #{ae_forward.1} parent=11 // pred_check
          %p559 = pneg %p207
        $region38: #{ae_forward.1} parent=11 // pred_check_branch
          %561 = sbr.rel (%p559) target = $region40
        $region39: #{ae_forward.1} parent=11 // pred_region
          _
        $region40: #{ae_forward.1} parent=11 // pred_fallthru
          _
        // Predicated region
        $region41: #{ae_forward.1} parent=11 // pred_check
          %p562 = pneg %p228
        $region42: #{ae_forward.1} parent=11 // pred_check_branch
          %564 = sbr.rel (%p562) target = $region44
        $region43: #{ae_forward.1} parent=11 // pred_region
          _
        $region44: #{ae_forward.1} parent=11 // pred_fallthru
          _
        // Predicated region
        $region45: #{ae_forward.1} parent=11 // pred_check
          %p565 = pneg %p249
        $region46: #{ae_forward.1} parent=11 // pred_check_branch
          %567 = sbr.rel (%p565) target = $region48
        $region47: #{ae_forward.1} parent=11 // pred_region
          _
        $region48: #{ae_forward.1} parent=11 // pred_fallthru
          _
        // Predicated region
        $region49: #{ae_forward.1} parent=11 // pred_check
          %p568 = pneg %p270
        $region50: #{ae_forward.1} parent=11 // pred_check_branch
          %570 = sbr.rel (%p568) target = $region52
        $region51: #{ae_forward.1} parent=11 // pred_region
          _
        $region52: #{ae_forward.1} parent=11 // pred_fallthru
          _
        // Predicated region
        $region53: #{ae_forward.1} parent=11 // pred_check
          %p571 = pneg %p291
        $region54: #{ae_forward.1} parent=11 // pred_check_branch
          %573 = sbr.rel (%p571) target = $region56
        $region55: #{ae_forward.1} parent=11 // pred_region
          _
        $region56: #{ae_forward.1} parent=11 // pred_fallthru
          _
        // Predicated region
        $region57: #{ae_forward.1} parent=11 // pred_check
          %p574 = pneg %p312
        $region58: #{ae_forward.1} parent=11 // pred_check_branch
          %576 = sbr.rel (%p574) target = $region60
        $region59: #{ae_forward.1} parent=11 // pred_region
          _
        $region60: #{ae_forward.1} parent=11 // pred_fallthru
          _
        // Predicated region
        $region61: #{ae_forward.1} parent=11 // pred_check
          %p577 = pneg %p333
        $region62: #{ae_forward.1} parent=11 // pred_check_branch
          %579 = sbr.rel (%p577) target = $region64
        $region63: #{ae_forward.1} parent=11 // pred_region
          _
        $region64: #{ae_forward.1} parent=11 // pred_fallthru
          _
        // Predicated region
        $region65: #{ae_forward.1} parent=11 // pred_check
          %p580 = pneg %p354
        $region66: #{ae_forward.1} parent=11 // pred_check_branch
          %582 = sbr.rel (%p580) target = $region68
        $region67: #{ae_forward.1} parent=11 // pred_region
          _
        $region68: #{ae_forward.1} parent=11 // pred_fallthru
          _
        // Predicated region
        $region69: #{ae_forward.1} parent=11 // pred_check
          %p583 = pneg %p375
        $region70: #{ae_forward.1} parent=11 // pred_check_branch
          %585 = sbr.rel (%p583) target = $region72
        $region71: #{ae_forward.1} parent=11 // pred_region
          _
        $region72: #{ae_forward.1} parent=11 // pred_fallthru
          _
        // Predicated region
        $region73: #{ae_forward.1} parent=11 // pred_check
          %p586 = pneg %p396
        $region74: #{ae_forward.1} parent=11 // pred_check_branch
          %588 = sbr.rel (%p586) target = $region76
        $region75: #{ae_forward.1} parent=11 // pred_region
          _
        $region76: #{ae_forward.1} parent=11 // pred_fallthru
          _
      $region12: #{ae_forward.1} parent=5 // pred_fallthru
        _
      %p589 = scmp.lt.s32.totalorder %s34, 2
      // Predicated region
      $region77: #{ae_forward.1} parent=5 // pred_check
        %p590 = pneg %p589
      $region78: #{ae_forward.1} parent=5 // pred_check_branch
        %592 = sbr.rel (%p590) target = $region80
      $region79: #{ae_forward.1} parent=5 // pred_region
        // Predicated region
        $region81: #{ae_forward.1} parent=79 // pred_check
          %p593 = pneg %p54
        $region82: #{ae_forward.1} parent=79 // pred_check_branch
          %595 = sbr.rel (%p593) target = $region84
        $region83: #{ae_forward.1} parent=79 // pred_region
          %s596 = smul.u32 2, %s34
          %p597 = scmp.lt.s32.totalorder %s596, 3
          %s598 = scalar_select %p597, %s596, 3
          %s599 = smul.addr %s598, 8
          %s600 = scalar_lea.vmem %s0, %s599
          %s601 = smul.u32 2, %s34
        $region84: #{ae_forward.1} parent=79 // pred_fallthru
          _
      $region80: #{ae_forward.1} parent=5 // pred_fallthru
        _
      %p602 = scmp.le.s32.totalorder 1, %s34
      %p603 = scmp.lt.s32.totalorder %s34, 3
      %p604 = pnand %p602, %p603
      %p605 = pneg %p604
      // Predicated region
      $region85: #{ae_forward.1} parent=5 // pred_check
        _
      $region86: #{ae_forward.1} parent=5 // pred_check_branch
        %607 = sbr.rel (%p604) target = $region88
      $region87: #{ae_forward.1} parent=5 // pred_region
        %s608 = ssub.s32 %s34, 1
        %s609 = smul.u32 2, %s39
        %p610 = scmp.lt.s32.totalorder %s609, 3
        %s611 = scalar_select %p610, %s609, 3
        %s612 = smul.addr %s611, 8
        %s613 = scalar_lea.vmem %s0, %s612
        %p614 = pneg %p60
        %p615 = pneg %p57
        %p616 = pneg %p81
        %p617 = pneg %p78
        %p618 = pneg %p102
        %p619 = pneg %p99
        %p620 = pneg %p123
        %p621 = pneg %p120
        %p622 = pneg %p144
        %p623 = pneg %p141
        %p624 = pneg %p165
        %p625 = pneg %p162
        %p626 = pneg %p186
        %p627 = pneg %p183
        %p628 = pneg %p207
        %p629 = pneg %p204
        %p630 = pneg %p228
        %p631 = pneg %p225
        %p632 = pneg %p249
        %p633 = pneg %p246
        %p634 = pneg %p270
        %p635 = pneg %p267
        %p636 = pneg %p291
        %p637 = pneg %p288
        %p638 = pneg %p312
        %p639 = pneg %p309
        %p640 = pneg %p333
        %p641 = pneg %p330
        %p642 = pneg %p354
        %p643 = pneg %p351
        %p644 = pneg %p375
        %p645 = pneg %p372
        %p646 = pneg %p396
        %p647 = pneg %p393
        %p648 = pneg %p422
        %p649 = pneg %p419
        %s650 = smul.u32 2, %s39
        %p651 = scmp.lt.s32.totalorder %s650, 3
        %s652 = scalar_select %p651, %s650, 3
        %s653 = smul.addr %s652, 8
        %s654 = scalar_lea.vmem %s17, %s653
        %p655 = pneg %p448
        %p656 = pneg %p445
        %s657 = sand.u32 %s435, 1
        %s658 = scalar_lea.sflag [#allocation3], %s657
        %s659 = sand.u32 %s435, 1
        %s660 = smul.addr %s659, 16
        %s661 = scalar_lea.vmem [#allocation2], %s660
        %p662 = pneg %p474
        %p663 = pneg %p471
        %s664 = sand.u32 %s39, 1
        %s665 = scalar_lea.sflag [#allocation5], %s664
        %s666 = sand.u32 %s461, 1
        %s667 = smul.addr %s666, 16
        %s668 = scalar_lea.vmem [#allocation4], %s667
        %p669 = pneg %p500
        %p670 = pneg %p497
        %s671 = sand.u32 %s39, 1
        %s672 = scalar_lea.sflag [#allocation5], %s671
        %s673 = sand.u32 %s487, 1
        %s674 = smul.addr %s673, 16
        %s675 = scalar_lea.vmem [#allocation6], %s674
        %p676 = pneg %p526
        %p677 = pneg %p523
        %s678 = smul.u32 2, %s39
        %p679 = scmp.lt.s32.totalorder %s678, 3
        %s680 = scalar_select %p679, %s678, 3
        %s681 = smul.addr %s680, 8
        %s682 = scalar_lea.vmem %s21, %s681
        %s683 = smul.u32 2, %s39
        %p684 = scmp.lt.s32.totalorder %s683, 3
        %s685 = scalar_select %p684, %s683, 3
        %s686 = smul.addr %s685, 8
        %s687 = scalar_lea.vmem %s0, %s686
        %s688 = smul.u32 2, %s39
        %s689 = smul.u32 2, %s39
        %p690 = scmp.lt.s32.totalorder %s689, 3
        %s691 = scalar_select %p690, %s689, 3
        %s692 = smul.addr %s691, 8
        %s693 = scalar_lea.vmem %s17, %s692
        %s694 = smul.u32 2, %s39
        %s695 = smul.u32 2, %s39
        %s696 = smul.u32 2, %s39
        %s697 = smul.u32 2, %s39
        %s698 = smul.u32 2, %s39
        %p699 = scmp.lt.s32.totalorder %s698, 3
        %s700 = scalar_select %p699, %s698, 3
        %s701 = smul.addr %s700, 8
        %s702 = scalar_lea.vmem %s21, %s701
        %s703 = smul.u32 2, %s39
        %v704 = vld [vmem:[%s687] sm:$0xff]
        %v705 = vld [vmem:[%s687 + $0x8] sm:$0xff]
        %v706 = vld [vmem:[%s1] sm:$0xff]
        %v707 = vld [vmem:[%s1 + $0x8] sm:$0xff]
        %v708 = vld [vmem:[%s1 + $0x10] sm:$0xff]
        %v709 = vld [vmem:[%s1 + $0x18] sm:$0xff]
        %v710 = vld [vmem:[%s1 + $0x20] sm:$0xff]
        %v711 = vld [vmem:[%s1 + $0x28] sm:$0xff]
        %v712 = vld [vmem:[%s1 + $0x30] sm:$0xff]
        %v713 = vld [vmem:[%s1 + $0x38] sm:$0xff]
        %v714 = vld [vmem:[%s1 + $0x40] sm:$0xff]
        %v715 = vld [vmem:[%s1 + $0x48] sm:$0xff]
        %v716 = vld [vmem:[%s1 + $0x50] sm:$0xff]
        %v717 = vld [vmem:[%s1 + $0x58] sm:$0xff]
        %v718 = vld [vmem:[%s1 + $0x60] sm:$0xff]
        %v719 = vld [vmem:[%s1 + $0x68] sm:$0xff]
        %v720 = vld [vmem:[%s1 + $0x70] sm:$0xff]
        %v721 = vld [vmem:[%s1 + $0x78] sm:$0xff]
        %v722 = vld [vmem:[%s9] sm:$0x1]
        %v724 = vperm.slane %v722, 0
        %726 = vmatpush.msra.mxu0 %v721
        %727 = vmatpush.msra.mxu0 %v720
        %728 = vmatpush.msra.mxu0 %v719
        %729 = vmatpush.msra.mxu0 %v718
        %730 = vmatpush.msra.mxu0 %v717
        %731 = vmatpush.msra.mxu0 %v716
        %732 = vmatpush.msra.mxu0 %v715
        %733 = vmatpush.msra.mxu0 %v714
        %734 = vmatpush.msra.mxu0 %v713
        %735 = vmatpush.msra.mxu0 %v712
        %736 = vmatpush.msra.mxu0 %v711
        %737 = vmatpush.msra.mxu0 %v710
        %738 = vmatpush.msra.mxu0 %v709
        %739 = vmatpush.msra.mxu0 %v708
        %740 = vmatpush.msra.mxu0 %v707
        %741 = vmatpush.msra.mxu0 %v706
        %742 = vmatmul.f32.gmra.mxu0 %v704
        %v743 = vpop.f32.mrf.mxu0
        %v744 = vadd.f32 %v724, %v743
        %745 = vmatmul.f32.gmra.mxu0 %v705
        %v746 = vpop.f32.mrf.mxu0
        %v747 = vadd.f32 %v724, %v746
        %748 = vdwg.mxu0
        %v749 = vmax.f32 %v744, 0.0
        %v750 = vmax.f32 %v747, 0.0
        %751 = vst [vmem:[%s661] sm:$0xff] %v749
        %752 = vst [vmem:[%s661 + $0x8] sm:$0xff] %v750
        %v753 = vld [vmem:[%s2] sm:$0xff]
        %v754 = vld [vmem:[%s2 + $0x8] sm:$0xff]
        %v755 = vld [vmem:[%s2 + $0x10] sm:$0xff]
        %v756 = vld [vmem:[%s2 + $0x18] sm:$0xff]
        %v757 = vld [vmem:[%s2 + $0x20] sm:$0xff]
        %v758 = vld [vmem:[%s2 + $0x28] sm:$0xff]
        %v759 = vld [vmem:[%s2 + $0x30] sm:$0xff]
        %v760 = vld [vmem:[%s2 + $0x38] sm:$0xff]
        %v761 = vld [vmem:[%s2 + $0x40] sm:$0xff]
        %v762 = vld [vmem:[%s2 + $0x48] sm:$0xff]
        %v763 = vld [vmem:[%s2 + $0x50] sm:$0xff]
        %v764 = vld [vmem:[%s2 + $0x58] sm:$0xff]
        %v765 = vld [vmem:[%s2 + $0x60] sm:$0xff]
        %v766 = vld [vmem:[%s2 + $0x68] sm:$0xff]
        %v767 = vld [vmem:[%s2 + $0x70] sm:$0xff]
        %v768 = vld [vmem:[%s2 + $0x78] sm:$0xff]
        %v769 = vld [vmem:[%s10] sm:$0x1]
        %v771 = vperm.slane %v769, 0
        %773 = vmatpush.msra.mxu0 %v768
        %774 = vmatpush.msra.mxu0 %v767
        %775 = vmatpush.msra.mxu0 %v766
        %776 = vmatpush.msra.mxu0 %v765
        %777 = vmatpush.msra.mxu0 %v764
        %778 = vmatpush.msra.mxu0 %v763
        %779 = vmatpush.msra.mxu0 %v762
        %780 = vmatpush.msra.mxu0 %v761
        %781 = vmatpush.msra.mxu0 %v760
        %782 = vmatpush.msra.mxu0 %v759
        %783 = vmatpush.msra.mxu0 %v758
        %784 = vmatpush.msra.mxu0 %v757
        %785 = vmatpush.msra.mxu0 %v756
        %786 = vmatpush.msra.mxu0 %v755
        %787 = vmatpush.msra.mxu0 %v754
        %788 = vmatpush.msra.mxu0 %v753
        %789 = vmatmul.f32.gmra.mxu0 %v749
        %v790 = vpop.f32.mrf.mxu0
        %v791 = vadd.f32 %v771, %v790
        %792 = vmatmul.f32.gmra.mxu0 %v750
        %v793 = vpop.f32.mrf.mxu0
        %v794 = vadd.f32 %v771, %v793
        %795 = vdwg.mxu0
        %v796 = vmax.f32 %v791, 0.0
        %v797 = vmax.f32 %v794, 0.0
        %798 = vst [vmem:[%s668] sm:$0xff] %v796
        %799 = vst [vmem:[%s668 + $0x8] sm:$0xff] %v797
        %v800 = vld [vmem:[%s3] sm:$0xff]
        %v801 = vld [vmem:[%s3 + $0x8] sm:$0xff]
        %v802 = vld [vmem:[%s3 + $0x10] sm:$0xff]
        %v803 = vld [vmem:[%s3 + $0x18] sm:$0xff]
        %v804 = vld [vmem:[%s3 + $0x20] sm:$0xff]
        %v805 = vld [vmem:[%s3 + $0x28] sm:$0xff]
        %v806 = vld [vmem:[%s3 + $0x30] sm:$0xff]
        %v807 = vld [vmem:[%s3 + $0x38] sm:$0xff]
        %v808 = vld [vmem:[%s3 + $0x40] sm:$0xff]
        %v809 = vld [vmem:[%s3 + $0x48] sm:$0xff]
        %v810 = vld [vmem:[%s3 + $0x50] sm:$0xff]
        %v811 = vld [vmem:[%s3 + $0x58] sm:$0xff]
        %v812 = vld [vmem:[%s3 + $0x60] sm:$0xff]
        %v813 = vld [vmem:[%s3 + $0x68] sm:$0xff]
        %v814 = vld [vmem:[%s3 + $0x70] sm:$0xff]
        %v815 = vld [vmem:[%s3 + $0x78] sm:$0xff]
        %v816 = vld [vmem:[%s11] sm:$0x1]
        %v818 = vperm.slane %v816, 0
        %820 = vmatpush.msra.mxu0 %v815
        %821 = vmatpush.msra.mxu0 %v814
        %822 = vmatpush.msra.mxu0 %v813
        %823 = vmatpush.msra.mxu0 %v812
        %824 = vmatpush.msra.mxu0 %v811
        %825 = vmatpush.msra.mxu0 %v810
        %826 = vmatpush.msra.mxu0 %v809
        %827 = vmatpush.msra.mxu0 %v808
        %828 = vmatpush.msra.mxu0 %v807
        %829 = vmatpush.msra.mxu0 %v806
        %830 = vmatpush.msra.mxu0 %v805
        %831 = vmatpush.msra.mxu0 %v804
        %832 = vmatpush.msra.mxu0 %v803
        %833 = vmatpush.msra.mxu0 %v802
        %834 = vmatpush.msra.mxu0 %v801
        %835 = vmatpush.msra.mxu0 %v800
        %836 = vmatmul.f32.gmra.mxu0 %v796
        %v837 = vpop.f32.mrf.mxu0
        %v838 = vadd.f32 %v818, %v837
        %839 = vmatmul.f32.gmra.mxu0 %v797
        %v840 = vpop.f32.mrf.mxu0
        %v841 = vadd.f32 %v818, %v840
        %842 = vdwg.mxu0
        %v843 = vmax.f32 %v838, 0.0
        %v844 = vmax.f32 %v841, 0.0
        %845 = vst [vmem:[%s675] sm:$0xff] %v843
        %846 = vst [vmem:[%s675 + $0x8] sm:$0xff] %v844
        %v847 = vld [vmem:[%s4] sm:$0xff]
        %v848 = vld [vmem:[%s4 + $0x8] sm:$0xff]
        %v849 = vld [vmem:[%s4 + $0x10] sm:$0xff]
        %v850 = vld [vmem:[%s4 + $0x18] sm:$0xff]
        %v851 = vld [vmem:[%s4 + $0x20] sm:$0xff]
        %v852 = vld [vmem:[%s4 + $0x28] sm:$0xff]
        %v853 = vld [vmem:[%s4 + $0x30] sm:$0xff]
        %v854 = vld [vmem:[%s4 + $0x38] sm:$0xff]
        %v855 = vld [vmem:[%s4 + $0x40] sm:$0xff]
        %v856 = vld [vmem:[%s4 + $0x48] sm:$0xff]
        %v857 = vld [vmem:[%s4 + $0x50] sm:$0xff]
        %v858 = vld [vmem:[%s4 + $0x58] sm:$0xff]
        %v859 = vld [vmem:[%s4 + $0x60] sm:$0xff]
        %v860 = vld [vmem:[%s4 + $0x68] sm:$0xff]
        %v861 = vld [vmem:[%s4 + $0x70] sm:$0xff]
        %v862 = vld [vmem:[%s4 + $0x78] sm:$0xff]
        %v863 = vld [vmem:[%s12] sm:$0x1]
        %v865 = vperm.slane %v863, 0
        %867 = vmatpush.msra.mxu0 %v862
        %868 = vmatpush.msra.mxu0 %v861
        %869 = vmatpush.msra.mxu0 %v860
        %870 = vmatpush.msra.mxu0 %v859
        %871 = vmatpush.msra.mxu0 %v858
        %872 = vmatpush.msra.mxu0 %v857
        %873 = vmatpush.msra.mxu0 %v856
        %874 = vmatpush.msra.mxu0 %v855
        %875 = vmatpush.msra.mxu0 %v854
        %876 = vmatpush.msra.mxu0 %v853
        %877 = vmatpush.msra.mxu0 %v852
        %878 = vmatpush.msra.mxu0 %v851
        %879 = vmatpush.msra.mxu0 %v850
        %880 = vmatpush.msra.mxu0 %v849
        %881 = vmatpush.msra.mxu0 %v848
        %882 = vmatpush.msra.mxu0 %v847
        %883 = vmatmul.f32.gmra.mxu0 %v843
        %v884 = vpop.f32.mrf.mxu0
        %v885 = vadd.f32 %v865, %v884
        %886 = vmatmul.f32.gmra.mxu0 %v844
        %v887 = vpop.f32.mrf.mxu0
        %v888 = vadd.f32 %v865, %v887
        %889 = vdwg.mxu0
        %890 = vst [vmem:[%s702] sm:$0xff] %v885
        %891 = vst [vmem:[%s702 + $0x8] sm:$0xff] %v888
        %v892 = vld [vmem:[%s5] sm:$0xff]
        %v893 = vld [vmem:[%s5 + $0x8] sm:$0xff]
        %v894 = vld [vmem:[%s5 + $0x10] sm:$0xff]
        %v895 = vld [vmem:[%s5 + $0x18] sm:$0xff]
        %v896 = vld [vmem:[%s5 + $0x20] sm:$0xff]
        %v897 = vld [vmem:[%s5 + $0x28] sm:$0xff]
        %v898 = vld [vmem:[%s5 + $0x30] sm:$0xff]
        %v899 = vld [vmem:[%s5 + $0x38] sm:$0xff]
        %v900 = vld [vmem:[%s5 + $0x40] sm:$0xff]
        %v901 = vld [vmem:[%s5 + $0x48] sm:$0xff]
        %v902 = vld [vmem:[%s5 + $0x50] sm:$0xff]
        %v903 = vld [vmem:[%s5 + $0x58] sm:$0xff]
        %v904 = vld [vmem:[%s5 + $0x60] sm:$0xff]
        %v905 = vld [vmem:[%s5 + $0x68] sm:$0xff]
        %v906 = vld [vmem:[%s5 + $0x70] sm:$0xff]
        %v907 = vld [vmem:[%s5 + $0x78] sm:$0xff]
        %v908 = vld [vmem:[%s13] sm:$0x1]
        %v910 = vperm.slane %v908, 0
        %912 = vmatpush.msra.mxu0 %v907
        %913 = vmatpush.msra.mxu0 %v906
        %914 = vmatpush.msra.mxu0 %v905
        %915 = vmatpush.msra.mxu0 %v904
        %916 = vmatpush.msra.mxu0 %v903
        %917 = vmatpush.msra.mxu0 %v902
        %918 = vmatpush.msra.mxu0 %v901
        %919 = vmatpush.msra.mxu0 %v900
        %920 = vmatpush.msra.mxu0 %v899
        %921 = vmatpush.msra.mxu0 %v898
        %922 = vmatpush.msra.mxu0 %v897
        %923 = vmatpush.msra.mxu0 %v896
        %924 = vmatpush.msra.mxu0 %v895
        %925 = vmatpush.msra.mxu0 %v894
        %926 = vmatpush.msra.mxu0 %v893
        %927 = vmatpush.msra.mxu0 %v892
        %928 = vmatmul.f32.gmra.mxu0 %v885
        %v929 = vpop.f32.mrf.mxu0
        %v930 = vadd.f32 %v910, %v929
        %931 = vmatmul.f32.gmra.mxu0 %v888
        %v932 = vpop.f32.mrf.mxu0
        %v933 = vadd.f32 %v910, %v932
        %934 = vdwg.mxu0
        %v935 = vmax.f32 %v930, 0.0
        %v936 = vmax.f32 %v933, 0.0
        %v937 = vld [vmem:[%s6] sm:$0xff]
        %v938 = vld [vmem:[%s6 + $0x8] sm:$0xff]
        %v939 = vld [vmem:[%s6 + $0x10] sm:$0xff]
        %v940 = vld [vmem:[%s6 + $0x18] sm:$0xff]
        %v941 = vld [vmem:[%s6 + $0x20] sm:$0xff]
        %v942 = vld [vmem:[%s6 + $0x28] sm:$0xff]
        %v943 = vld [vmem:[%s6 + $0x30] sm:$0xff]
        %v944 = vld [vmem:[%s6 + $0x38] sm:$0xff]
        %v945 = vld [vmem:[%s6 + $0x40] sm:$0xff]
        %v946 = vld [vmem:[%s6 + $0x48] sm:$0xff]
        %v947 = vld [vmem:[%s6 + $0x50] sm:$0xff]
        %v948 = vld [vmem:[%s6 + $0x58] sm:$0xff]
        %v949 = vld [vmem:[%s6 + $0x60] sm:$0xff]
        %v950 = vld [vmem:[%s6 + $0x68] sm:$0xff]
        %v951 = vld [vmem:[%s6 + $0x70] sm:$0xff]
        %v952 = vld [vmem:[%s6 + $0x78] sm:$0xff]
        %v953 = vld [vmem:[%s14] sm:$0x1]
        %v955 = vperm.slane %v953, 0
        %957 = vmatpush.msra.mxu0 %v952
        %958 = vmatpush.msra.mxu0 %v951
        %959 = vmatpush.msra.mxu0 %v950
        %960 = vmatpush.msra.mxu0 %v949
        %961 = vmatpush.msra.mxu0 %v948
        %962 = vmatpush.msra.mxu0 %v947
        %963 = vmatpush.msra.mxu0 %v946
        %964 = vmatpush.msra.mxu0 %v945
        %965 = vmatpush.msra.mxu0 %v944
        %966 = vmatpush.msra.mxu0 %v943
        %967 = vmatpush.msra.mxu0 %v942
        %968 = vmatpush.msra.mxu0 %v941
        %969 = vmatpush.msra.mxu0 %v940
        %970 = vmatpush.msra.mxu0 %v939
        %971 = vmatpush.msra.mxu0 %v938
        %972 = vmatpush.msra.mxu0 %v937
        %973 = vmatmul.f32.gmra.mxu0 %v935
        %v974 = vpop.f32.mrf.mxu0
        %v975 = vadd.f32 %v955, %v974
        %976 = vmatmul.f32.gmra.mxu0 %v936
        %v977 = vpop.f32.mrf.mxu0
        %v978 = vadd.f32 %v955, %v977
        %979 = vdwg.mxu0
        %v980 = vmax.f32 %v975, 0.0
        %v981 = vmax.f32 %v978, 0.0
        %v982 = vld [vmem:[%s7] sm:$0xff]
        %v983 = vld [vmem:[%s7 + $0x8] sm:$0xff]
        %v984 = vld [vmem:[%s7 + $0x10] sm:$0xff]
        %v985 = vld [vmem:[%s7 + $0x18] sm:$0xff]
        %v986 = vld [vmem:[%s7 + $0x20] sm:$0xff]
        %v987 = vld [vmem:[%s7 + $0x28] sm:$0xff]
        %v988 = vld [vmem:[%s7 + $0x30] sm:$0xff]
        %v989 = vld [vmem:[%s7 + $0x38] sm:$0xff]
        %v990 = vld [vmem:[%s7 + $0x40] sm:$0xff]
        %v991 = vld [vmem:[%s7 + $0x48] sm:$0xff]
        %v992 = vld [vmem:[%s7 + $0x50] sm:$0xff]
        %v993 = vld [vmem:[%s7 + $0x58] sm:$0xff]
        %v994 = vld [vmem:[%s7 + $0x60] sm:$0xff]
        %v995 = vld [vmem:[%s7 + $0x68] sm:$0xff]
        %v996 = vld [vmem:[%s7 + $0x70] sm:$0xff]
        %v997 = vld [vmem:[%s7 + $0x78] sm:$0xff]
        %v998 = vld [vmem:[%s15] sm:$0x1]
        %v1000 = vperm.slane %v998, 0
        %1002 = vmatpush.msra.mxu0 %v997
        %1003 = vmatpush.msra.mxu0 %v996
        %1004 = vmatpush.msra.mxu0 %v995
        %1005 = vmatpush.msra.mxu0 %v994
        %1006 = vmatpush.msra.mxu0 %v993
        %1007 = vmatpush.msra.mxu0 %v992
        %1008 = vmatpush.msra.mxu0 %v991
        %1009 = vmatpush.msra.mxu0 %v990
        %1010 = vmatpush.msra.mxu0 %v989
        %1011 = vmatpush.msra.mxu0 %v988
        %1012 = vmatpush.msra.mxu0 %v987
        %1013 = vmatpush.msra.mxu0 %v986
        %1014 = vmatpush.msra.mxu0 %v985
        %1015 = vmatpush.msra.mxu0 %v984
        %1016 = vmatpush.msra.mxu0 %v983
        %1017 = vmatpush.msra.mxu0 %v982
        %1018 = vmatmul.f32.gmra.mxu0 %v980
        %v1019 = vpop.f32.mrf.mxu0
        %v1020 = vadd.f32 %v1000, %v1019
        %1021 = vmatmul.f32.gmra.mxu0 %v981
        %v1022 = vpop.f32.mrf.mxu0
        %v1023 = vadd.f32 %v1000, %v1022
        %1024 = vdwg.mxu0
        %v1025 = vmax.f32 %v1020, 0.0
        %v1026 = vmax.f32 %v1023, 0.0
        %v1027 = vld [vmem:[%s8] sm:$0xff]
        %v1028 = vld [vmem:[%s8 + $0x8] sm:$0xff]
        %v1029 = vld [vmem:[%s8 + $0x10] sm:$0xff]
        %v1030 = vld [vmem:[%s8 + $0x18] sm:$0xff]
        %v1031 = vld [vmem:[%s8 + $0x20] sm:$0xff]
        %v1032 = vld [vmem:[%s8 + $0x28] sm:$0xff]
        %v1033 = vld [vmem:[%s8 + $0x30] sm:$0xff]
        %v1034 = vld [vmem:[%s8 + $0x38] sm:$0xff]
        %v1035 = vld [vmem:[%s8 + $0x40] sm:$0xff]
        %v1036 = vld [vmem:[%s8 + $0x48] sm:$0xff]
        %v1037 = vld [vmem:[%s8 + $0x50] sm:$0xff]
        %v1038 = vld [vmem:[%s8 + $0x58] sm:$0xff]
        %v1039 = vld [vmem:[%s8 + $0x60] sm:$0xff]
        %v1040 = vld [vmem:[%s8 + $0x68] sm:$0xff]
        %v1041 = vld [vmem:[%s8 + $0x70] sm:$0xff]
        %v1042 = vld [vmem:[%s8 + $0x78] sm:$0xff]
        %v1043 = vld [vmem:[%s16] sm:$0x1]
        %v1045 = vperm.slane %v1043, 0
        %1047 = vmatpush.msra.mxu0 %v1042
        %1048 = vmatpush.msra.mxu0 %v1041
        %1049 = vmatpush.msra.mxu0 %v1040
        %1050 = vmatpush.msra.mxu0 %v1039
        %1051 = vmatpush.msra.mxu0 %v1038
        %1052 = vmatpush.msra.mxu0 %v1037
        %1053 = vmatpush.msra.mxu0 %v1036
        %1054 = vmatpush.msra.mxu0 %v1035
        %1055 = vmatpush.msra.mxu0 %v1034
        %1056 = vmatpush.msra.mxu0 %v1033
        %1057 = vmatpush.msra.mxu0 %v1032
        %1058 = vmatpush.msra.mxu0 %v1031
        %1059 = vmatpush.msra.mxu0 %v1030
        %1060 = vmatpush.msra.mxu0 %v1029
        %1061 = vmatpush.msra.mxu0 %v1028
        %1062 = vmatpush.msra.mxu0 %v1027
        %1063 = vmatmul.f32.gmra.mxu0 %v1025
        %v1064 = vpop.f32.mrf.mxu0
        %v1065 = vadd.f32 %v1045, %v1064
        %1066 = vmatmul.f32.gmra.mxu0 %v1026
        %v1067 = vpop.f32.mrf.mxu0
        %v1068 = vadd.f32 %v1045, %v1067
        %1069 = vdwg.mxu0
        %1070 = vst [vmem:[%s693] sm:$0xff] %v1065
        %1071 = vst [vmem:[%s693 + $0x8] sm:$0xff] %v1068
        %s1072 = smul.u32 2, %s39
        %p1073 = scmp.lt.s32.totalorder %s1072, 3
        %s1074 = scalar_select %p1073, %s1072, 3
        %s1075 = smul.addr %s1074, 8
        %s1076 = scalar_lea.vmem %s17, %s1075
        %s1077 = sand.u32 %s435, 1
        %s1078 = scalar_lea.sflag [#allocation3], %s1077
        %s1079 = sand.u32 %s435, 1
        %s1080 = smul.addr %s1079, 16
        %s1081 = scalar_lea.vmem [#allocation2], %s1080
        %s1082 = sand.u32 %s39, 1
        %s1083 = scalar_lea.sflag [#allocation5], %s1082
        %s1084 = sand.u32 %s461, 1
        %s1085 = smul.addr %s1084, 16
        %s1086 = scalar_lea.vmem [#allocation4], %s1085
        %s1087 = sand.u32 %s39, 1
        %s1088 = scalar_lea.sflag [#allocation5], %s1087
        %s1089 = sand.u32 %s487, 1
        %s1090 = smul.addr %s1089, 16
        %s1091 = scalar_lea.vmem [#allocation6], %s1090
        %s1092 = smul.u32 2, %s39
        %p1093 = scmp.lt.s32.totalorder %s1092, 3
        %s1094 = scalar_select %p1093, %s1092, 3
        %s1095 = smul.addr %s1094, 8
        %s1096 = scalar_lea.vmem %s21, %s1095
        // Predicated region
        $region89: #{ae_forward.1} parent=87 // pred_check
          %p1097 = pneg %p419
        $region90: #{ae_forward.1} parent=87 // pred_check_branch
          %1099 = sbr.rel (%p1097) target = $region92
        $region91: #{ae_forward.1} parent=87 // pred_region
          %s1100 = smul.u32 2, %s39
        $region92: #{ae_forward.1} parent=87 // pred_fallthru
          _
        // Predicated region
        $region93: #{ae_forward.1} parent=87 // pred_check
          %p1101 = pneg %p445
        $region94: #{ae_forward.1} parent=87 // pred_check_branch
          %1103 = sbr.rel (%p1101) target = $region96
        $region95: #{ae_forward.1} parent=87 // pred_region
          %s1104 = smul.u32 2, %s39
          %1106 = vsyncadd %s1078, 0
          %s1107 = smul.addr %s1104, 8
          %s1108 = scalar_lea.hbm %s18, %s1107
          %s1109 = sshll.u32 %s1081, 4
          %s1110 = int_to_ptr.vmem [resolvable:$true] %s1109
          %s1111 = sshll.u32 %s1108, 4
          %s1112 = int_to_ptr.hbm [resolvable:$true] %s1111
          %1117 = dma.vmem_to_hbm [thread:$0]  %s1110, 256, %s1112, %s1078, 128, 128, 8
        $region96: #{ae_forward.1} parent=87 // pred_fallthru
          _
        // Predicated region
        $region97: #{ae_forward.1} parent=87 // pred_check
          %p1118 = pneg %p471
        $region98: #{ae_forward.1} parent=87 // pred_check_branch
          %1120 = sbr.rel (%p1118) target = $region100
        $region99: #{ae_forward.1} parent=87 // pred_region
          %s1121 = smul.u32 2, %s39
          %1123 = vsyncadd %s1083, 0
          %s1124 = smul.addr %s1121, 8
          %s1125 = scalar_lea.hbm %s19, %s1124
          %s1126 = sshll.u32 %s1086, 4
          %s1127 = int_to_ptr.vmem [resolvable:$true] %s1126
          %s1128 = sshll.u32 %s1125, 4
          %s1129 = int_to_ptr.hbm [resolvable:$true] %s1128
          %1134 = dma.vmem_to_hbm [thread:$0]  %s1127, 256, %s1129, %s1083, 128, 128, 8
        $region100: #{ae_forward.1} parent=87 // pred_fallthru
          _
        // Predicated region
        $region101: #{ae_forward.1} parent=87 // pred_check
          %p1135 = pneg %p497
        $region102: #{ae_forward.1} parent=87 // pred_check_branch
          %1137 = sbr.rel (%p1135) target = $region104
        $region103: #{ae_forward.1} parent=87 // pred_region
          %s1138 = smul.u32 2, %s39
          %1140 = vsyncadd %s1088, 0
          %s1141 = smul.addr %s1138, 8
          %s1142 = scalar_lea.hbm %s20, %s1141
          %s1143 = sshll.u32 %s1091, 4
          %s1144 = int_to_ptr.vmem [resolvable:$true] %s1143
          %s1145 = sshll.u32 %s1142, 4
          %s1146 = int_to_ptr.hbm [resolvable:$true] %s1145
          %1151 = dma.vmem_to_hbm [thread:$0]  %s1144, 256, %s1146, %s1088, 128, 128, 8
        $region104: #{ae_forward.1} parent=87 // pred_fallthru
          _
        // Predicated region
        $region105: #{ae_forward.1} parent=87 // pred_check
          %p1152 = pneg %p523
        $region106: #{ae_forward.1} parent=87 // pred_check_branch
          %1154 = sbr.rel (%p1152) target = $region108
        $region107: #{ae_forward.1} parent=87 // pred_region
          %s1155 = smul.u32 2, %s39
        $region108: #{ae_forward.1} parent=87 // pred_fallthru
          _
      $region88: #{ae_forward.1} parent=5 // pred_fallthru
        _
      %p1156 = scmp.le.s32.totalorder 2, %s34
      // Predicated region
      $region109: #{ae_forward.1} parent=5 // pred_check
        %p1157 = pneg %p1156
      $region110: #{ae_forward.1} parent=5 // pred_check_branch
        %1159 = sbr.rel (%p1157) target = $region112
      $region111: #{ae_forward.1} parent=5 // pred_region
        %s1160 = ssub.s32 %s34, 2
        // Predicated region
        $region113: #{ae_forward.1} parent=111 // pred_check
          %p1161 = pneg %p425
        $region114: #{ae_forward.1} parent=111 // pred_check_branch
          %1163 = sbr.rel (%p1161) target = $region116
        $region115: #{ae_forward.1} parent=111 // pred_region
          %s1164 = smul.u32 2, %s40
          %p1165 = scmp.lt.s32.totalorder %s1164, 3
          %s1166 = scalar_select %p1165, %s1164, 3
          %s1167 = smul.addr %s1166, 8
          %s1168 = scalar_lea.vmem %s17, %s1167
        $region116: #{ae_forward.1} parent=111 // pred_fallthru
          _
        // Predicated region
        $region117: #{ae_forward.1} parent=111 // pred_check
          %p1169 = pneg %p451
        $region118: #{ae_forward.1} parent=111 // pred_check_branch
          %1171 = sbr.rel (%p1169) target = $region120
        $region119: #{ae_forward.1} parent=111 // pred_region
          %s1172 = sand.u32 %s436, 1
          %s1173 = scalar_lea.sflag [#allocation3], %s1172
          %s1174 = sand.u32 %s436, 1
          %s1175 = smul.addr %s1174, 16
          %s1176 = scalar_lea.vmem [#allocation2], %s1175
          %1178 = dma.done %s1173, 256
        $region120: #{ae_forward.1} parent=111 // pred_fallthru
          _
        // Predicated region
        $region121: #{ae_forward.1} parent=111 // pred_check
          %p1179 = pneg %p477
        $region122: #{ae_forward.1} parent=111 // pred_check_branch
          %1181 = sbr.rel (%p1179) target = $region124
        $region123: #{ae_forward.1} parent=111 // pred_region
          %s1182 = sand.u32 %s40, 1
          %s1183 = scalar_lea.sflag [#allocation5], %s1182
          %s1184 = sand.u32 %s462, 1
          %s1185 = smul.addr %s1184, 16
          %s1186 = scalar_lea.vmem [#allocation4], %s1185
          %1188 = dma.done %s1183, 256
        $region124: #{ae_forward.1} parent=111 // pred_fallthru
          _
        // Predicated region
        $region125: #{ae_forward.1} parent=111 // pred_check
          %p1189 = pneg %p503
        $region126: #{ae_forward.1} parent=111 // pred_check_branch
          %1191 = sbr.rel (%p1189) target = $region128
        $region127: #{ae_forward.1} parent=111 // pred_region
          %s1192 = sand.u32 %s40, 1
          %s1193 = scalar_lea.sflag [#allocation5], %s1192
          %s1194 = sand.u32 %s488, 1
          %s1195 = smul.addr %s1194, 16
          %s1196 = scalar_lea.vmem [#allocation6], %s1195
          %1198 = dma.done %s1193, 256
        $region128: #{ae_forward.1} parent=111 // pred_fallthru
          _
        // Predicated region
        $region129: #{ae_forward.1} parent=111 // pred_check
          %p1199 = pneg %p529
        $region130: #{ae_forward.1} parent=111 // pred_check_branch
          %1201 = sbr.rel (%p1199) target = $region132
        $region131: #{ae_forward.1} parent=111 // pred_region
          %s1202 = smul.u32 2, %s40
          %p1203 = scmp.lt.s32.totalorder %s1202, 3
          %s1204 = scalar_select %p1203, %s1202, 3
          %s1205 = smul.addr %s1204, 8
          %s1206 = scalar_lea.vmem %s21, %s1205
        $region132: #{ae_forward.1} parent=111 // pred_fallthru
          _
      $region112: #{ae_forward.1} parent=5 // pred_fallthru
        _
    $region6: #{ae_forward.1} parent=1 // loop_footer
      %s38 = sadd.s32 1, %s34
    $region7: #{ae_forward.1} parent=1 // loop_footer_branch
      %33 = sbr.rel target = $region3
    $region8: #{ae_forward.1} parent=1 // loop_exit
      _
    %1207 = vsyncpa [#allocation3], 1
    %s1208 = scalar_lea.sflag [#allocation3], 1
    %1209 = vsyncpa %s1208, 1
    %1210 = vsyncpa [#allocation5], 1
    %s1211 = scalar_lea.sflag [#allocation5], 1
    %1212 = vsyncpa %s1211, 1

</llo_original>
